<compile_context>
chip_gen: v5e
topology: v5e:2x2
jax: 0.10.0
libtpu: 0.0.40
codegen_flags: <defaults>
</compile_context>

<pallas_src>
import functools

import numpy as np
import jax
import jax.numpy as jnp
from jax import lax
from jax.experimental import pallas as pl
from jax.experimental.pallas import tpu as pltpu


# ----------------------------------------------------------------------------- helpers
def _round_up(x, m):
    return (x + m - 1) // m * m


def _device_defaults():
    """(block_q, block_k, block_proj, vmem_request_cap) per TPU generation."""
    try:
        kind = jax.devices()[0].device_kind.lower()
    except Exception:
        kind = ""
    mib = 1024 * 1024
    if "v5" in kind:        # lowest HBM BW: bigger q tiles to cut K/V re-reads
        return 512, 512, 512, 96 * mib
    if "v6" in kind:        # 128 MiB VMEM: bigger k tiles too
        return 512, 1024, 512, 96 * mib
    # v7x (64 MiB physical VMEM per TC) or unknown: conservative tiles, headroom left.
    return 256, 512, 512, 44 * mib


# ----------------------------------------------------------------------------- kernel 1
def _proj_kernel(scale, num_heads, head_dim,
                 xq_ref, xk_ref, xv_ref,
                 wq_ref, bq_ref, wk_ref, bk_ref, wv_ref, bv_ref,
                 q_ref, k_ref, v_ref):
    """1x1-conv projections for one (batch, spatial-tile) block.

    x refs: (1, TP, Cin) bf16.  weights (Cin, Cout) bf16, bias (1, Cout) f32.
    outputs: (1, num_heads, TP, d) bf16 (Q pre-scaled by 1/sqrt(Cout))."""
    def proj(x_ref, w_ref, b_ref):
        return jnp.dot(x_ref[0], w_ref[...],
                       preferred_element_type=jnp.float32) + b_ref[...]

    q = (proj(xq_ref, wq_ref, bq_ref) * scale).astype(q_ref.dtype)   # (TP, Cout)
    k = proj(xk_ref, wk_ref, bk_ref).astype(k_ref.dtype)
    v = proj(xv_ref, wv_ref, bv_ref).astype(v_ref.dtype)
    for h in range(num_heads):                     # small static loop, cheap slices
        sl = slice(h * head_dim, (h + 1) * head_dim)
        q_ref[0, h] = q[:, sl]
        k_ref[0, h] = k[:, sl]
        v_ref[0, h] = v[:, sl]


# ----------------------------------------------------------------------------- kernel 2
def _flash_attn_kernel(n_valid, block_k, mask_keys,
                       q_ref, k_ref, v_ref, wo_ref, bo_ref,
                       out_ref,
                       m_sc, l_sc, acc_sc, oacc_sc):
    """Online-softmax attention; grid = (B, Nq, heads, Nk).

    q_ref: (1,1,TQ,d) bf16   k/v_ref: (1,1,TK,d) bf16
    wo_ref: (1,d,Co_p) bf16  bo_ref: (1,Co_p) f32
    out_ref: (1, Co_p, TQ) f32  (transposed tile -> NCHW output, no XLA transpose)
    scratch: m/l (TQ,1) f32, acc (TQ,d) f32 (per head), oacc (TQ,Co_p) f32 (all heads).
    """
    h = pl.program_id(2)
    kv = pl.program_id(3)
    nh = pl.num_programs(2)
    nk = pl.num_programs(3)

    @pl.when(kv == 0)
    def _():                                       # new head -> fresh softmax state
        m_sc[...] = jnp.full(m_sc.shape, -jnp.inf, m_sc.dtype)
        l_sc[...] = jnp.zeros_like(l_sc)
        acc_sc[...] = jnp.zeros_like(acc_sc)

    @pl.when((kv == 0) & (h == 0))
    def _():                                       # new q tile -> fresh output acc
        oacc_sc[...] = jnp.zeros_like(oacc_sc)

    q = q_ref[0, 0]                                # (TQ, d) bf16, already scaled
    k = k_ref[0, 0]                                # (TK, d) bf16
    v = v_ref[0, 0]                                # (TK, d) bf16

    # QK^T: contract the last dims (no relayout), bf16 in / f32 acc.
    s = lax.dot_general(q, k, (((1,), (1,)), ((), ())),
                        preferred_element_type=jnp.float32)           # (TQ, TK)
    if mask_keys:                                   # static flag: only when N was padded
        col = kv * block_k + lax.broadcasted_iota(jnp.int32, s.shape, 1)
        s = jnp.where(col < n_valid, s, -jnp.inf)

    m_prev = m_sc[...]
    m_new = jnp.maximum(m_prev, jnp.max(s, axis=-1, keepdims=True))
    alpha = jnp.exp(m_prev - m_new)
    p = jnp.exp(s - m_new)                                            # unnormalized
    l_sc[...] = alpha * l_sc[...] + jnp.sum(p, axis=-1, keepdims=True)
    acc_sc[...] = alpha * acc_sc[...] + jnp.dot(p.astype(v.dtype), v,
                                                preferred_element_type=jnp.float32)
    m_sc[...] = m_new

    @pl.when(kv == nk - 1)
    def _():
        # Normalize (one EUP reciprocal per row) and fold this head into the output
        # projection accumulator: bf16 x bf16 matmul, f32 accumulate.
        o_h = acc_sc[...] * pl.reciprocal(l_sc[...], approx=True)
        oacc_sc[...] += jnp.dot(o_h.astype(wo_ref.dtype), wo_ref[0],
                                preferred_element_type=jnp.float32)

    @pl.when((kv == nk - 1) & (h == nh - 1))
    def _():
        y = oacc_sc[...] + bo_ref[...]                                # (TQ, Co_p)
        out_ref[0] = jnp.transpose(y, (1, 0)).astype(out_ref.dtype)   # (Co_p, TQ)


# ----------------------------------------------------------------------------- wrapper
def multi_head_global_attention_2d(queries, keys, values, params, num_heads,
                                   *, block_q=None, block_k=None, block_proj=None):
    """queries/keys/values: NCHW float32.  Returns NCHW float32 (B, Cout, H, W)."""
    B, Cin, H, W = queries.shape
    assert keys.shape == queries.shape and values.shape == queries.shape
    N = H * W
    Cout = params["wq"].shape[1]
    assert Cout % num_heads == 0
    d = Cout // num_heads

    bq_t, bk_t, bp_t, vmem_cap = _device_defaults()
    bq_t, bk_t, bp_t = (block_q or bq_t), (block_k or bk_t), (block_proj or bp_t)

    # Tile / padding selection: pad N to a tile multiple (robust for any H*W).
    N128 = _round_up(N, 128)
    max_t = max(bq_t, bk_t, bp_t)
    if N128 <= max_t:
        TQ = TK = TP = N128
        N_pad = N128
    else:
        TQ, TK, TP = bq_t, bk_t, bp_t
        N_pad = _round_up(N, max_t)
    assert N_pad % TQ == 0 and N_pad % TK == 0 and N_pad % TP == 0
    mask_keys = (N_pad != N)

    Co_p = _round_up(Cout, 128)            # lane padding only for the final projection
    scale = 1.0 / np.sqrt(Cout)            # module divides scores by sqrt(out_channels)

    # ---- inputs: NCHW -> (B, N_pad, Cin) bf16 (single fused transpose/pad/cast pass)
    def to_bnc(x):
        x = jnp.transpose(x.reshape(B, Cin, N), (0, 2, 1)).astype(jnp.bfloat16)
        if N_pad != N:
            x = jnp.pad(x, ((0, 0), (0, N_pad - N), (0, 0)))
        return x

    xq, xk, xv = to_bnc(queries), to_bnc(keys), to_bnc(values)

    # ---- weights: bf16 for all MXU operands, f32 biases -----------------------------
    wq = params["wq"].astype(jnp.bfloat16)
    wk = params["wk"].astype(jnp.bfloat16)
    wv = params["wv"].astype(jnp.bfloat16)
    bq = params["bq"].astype(jnp.float32)
    bk = params["bk"].astype(jnp.float32)
    bv = params["bv"].astype(jnp.float32)
    wo = params["wo"].reshape(num_heads, d, Cout)
    wo = jnp.pad(wo, ((0, 0), (0, 0), (0, Co_p - Cout))).astype(jnp.bfloat16)
    bo = jnp.pad(params["bo"], ((0, 0), (0, Co_p - Cout))).astype(jnp.float32)

    # VMEM request: footprint-based with headroom, clamped per generation (never the
    # whole 64 MiB on v7x).
    fp = (2 * TQ * d * 2 + 3 * 2 * TK * d * 2 + 2 * d * Co_p * 2 + 2 * Co_p * 4
          + 2 * Co_p * TQ * 4 + (2 * TQ + TQ * d + TQ * Co_p) * 4 + 2 * TQ * TK * 4)
    vmem_limit = int(min(vmem_cap, max(32 * 1024 * 1024, 2 * fp)))

    # ---- kernel 1: Q/K/V projections (bf16, head-split, Q pre-scaled) ---------------
    x_spec = pl.BlockSpec((1, TP, Cin), lambda b, p: (b, p, 0))
    w_spec = pl.BlockSpec((Cin, Cout), lambda b, p: (0, 0))
    b_spec = pl.BlockSpec((1, Cout), lambda b, p: (0, 0))
    qkv_spec = pl.BlockSpec((1, num_heads, TP, d), lambda b, p: (b, 0, p, 0))
    qkv_shape = jax.ShapeDtypeStruct((B, num_heads, N_pad, d), jnp.bfloat16)

    q_p, k_p, v_p = pl.pallas_call(
        functools.partial(_proj_kernel, scale, num_heads, d),
        out_shape=(qkv_shape, qkv_shape, qkv_shape),
        grid=(B, N_pad // TP),
        in_specs=[x_spec, x_spec, x_spec,
                  w_spec, b_spec, w_spec, b_spec, w_spec, b_spec],
        out_specs=(qkv_spec, qkv_spec, qkv_spec),
        compiler_params=pltpu.CompilerParams(
            dimension_semantics=("parallel", "parallel"),
            vmem_limit_bytes=vmem_limit),
    )(xq, xk, xv, wq, bq, wk, bk, wv, bv)

    # ---- kernel 2: flash attention (heads on the grid) + fused output projection ----
    def attention_call(kv_buffers):
        def kv_spec(index_map):
            if kv_buffers > 2:
                try:
                    return pl.BlockSpec((1, 1, TK, d), index_map,
                                        pipeline_mode=pl.Buffered(kv_buffers))
                except Exception:
                    pass
            return pl.BlockSpec((1, 1, TK, d), index_map)

        return pl.pallas_call(
            functools.partial(_flash_attn_kernel, N, TK, mask_keys),
            out_shape=jax.ShapeDtypeStruct((B, Co_p, N_pad), jnp.float32),
            grid=(B, N_pad // TQ, num_heads, N_pad // TK),
            in_specs=[
                pl.BlockSpec((1, 1, TQ, d), lambda b, i, h, k: (b, h, i, 0)),
                kv_spec(lambda b, i, h, k: (b, h, k, 0)),
                kv_spec(lambda b, i, h, k: (b, h, k, 0)),
                pl.BlockSpec((1, d, Co_p), lambda b, i, h, k: (h, 0, 0)),
                pl.BlockSpec((1, Co_p), lambda b, i, h, k: (0, 0)),
            ],
            out_specs=pl.BlockSpec((1, Co_p, TQ), lambda b, i, h, k: (b, 0, i)),
            scratch_shapes=[
                pltpu.VMEM((TQ, 1), jnp.float32),     # running max m
                pltpu.VMEM((TQ, 1), jnp.float32),     # running sum l
                pltpu.VMEM((TQ, d), jnp.float32),     # per-head attention accumulator
                pltpu.VMEM((TQ, Co_p), jnp.float32),  # output-projection accumulator
            ],
            compiler_params=pltpu.CompilerParams(
                dimension_semantics=("parallel", "parallel", "arbitrary", "arbitrary"),
                vmem_limit_bytes=vmem_limit),
        )(q_p, k_p, v_p, wo, bo)

    try:
        out = jax.block_until_ready(attention_call(3))   # 3-deep K/V pipelining
    except Exception:
        out = jax.block_until_ready(attention_call(2))   # fallback: default buffering

    out = out[:, :Cout, :N]                  # drop channel / spatial padding
    return out.reshape(B, Cout, H, W)


# ----------------------------------------------------------------------------- reference
def _reference(queries, keys, values, params, num_heads):
    """Plain-JAX reference mirroring the PyTorch forward pass."""
    B, Cin, H, W = queries.shape
    N = H * W
    Cout = params["wq"].shape[1]
    d = Cout // num_heads

    def proj(x, w, b):  # 1x1 conv in NCHW
        x = jnp.transpose(x.reshape(B, x.shape[1], N), (0, 2, 1))  # (B, N, Cin)
        return jnp.transpose(x @ w + b, (0, 2, 1))                 # (B, Cout, N)

    q = proj(queries, params["wq"], params["bq"]).reshape(B, num_heads, d, N)
    k = proj(keys, params["wk"], params["bk"]).reshape(B, num_heads, d, N)
    v = proj(values, params["wv"], params["bv"]).reshape(B, num_heads, d, N)

    attn = jnp.einsum("bhdq,bhdk->bhqk", q, k) / np.sqrt(Cout)
    attn = jax.nn.softmax(attn, axis=-1)
    out = jnp.einsum("bhdk,bhqk->bhdq", v, attn).reshape(B, Cout, N)
    out = jnp.transpose(out, (0, 2, 1)) @ params["wo"] + params["bo"]
    return jnp.transpose(out, (0, 2, 1)).reshape(B, Cout, H, W)


def _init_params(key, in_channels, out_channels):
    """Deterministic synthetic init (Conv2d 1x1 weights stored as (Cin, Cout))."""
    ks = jax.random.split(key, 8)

    def u(k, shape, fan_in):
        bound = 1.0 / np.sqrt(fan_in)
        return jax.random.uniform(k, shape, jnp.float32, -bound, bound)

    return {
        "wq": u(ks[0], (in_channels, out_channels), in_channels),
        "bq": u(ks[1], (1, out_channels), in_channels),
        "wk": u(ks[2], (in_channels, out_channels), in_channels),
        "bk": u(ks[3], (1, out_channels), in_channels),
        "wv": u(ks[4], (in_channels, out_channels), in_channels),
        "bv": u(ks[5], (1, out_channels), in_channels),
        "wo": u(ks[6], (out_channels, out_channels), out_channels),
        "bo": u(ks[7], (1, out_channels), out_channels),
    }


if __name__ == "__main__":
    B, Cin, Cout, H, W = 2, 4, 8, 16, 16
    num_heads = 2

    root = jax.random.PRNGKey(0)
    k_params, k_q, k_k, k_v = jax.random.split(root, 4)

    params = _init_params(k_params, Cin, Cout)
    queries = jax.random.normal(k_q, (B, Cin, H, W), jnp.float32)
    keys = jax.random.normal(k_k, (B, Cin, H, W), jnp.float32)
    values = jax.random.normal(k_v, (B, Cin, H, W), jnp.float32)

    out = multi_head_global_attention_2d(queries, keys, values, params, num_heads)
    out = jax.block_until_ready(out)

    ref = jax.block_until_ready(_reference(queries, keys, values, params, num_heads))
    np.testing.assert_allclose(np.asarray(out), np.asarray(ref), rtol=2e-2, atol=2e-2)

    print("KERNEL_OK")
</pallas_src>

<mosaic_0001>
module attributes {stable_mosaic.version = 11 : i64} {
  func.func @_proj_kernel(%arg0: i32, %arg1: i32, %arg2: memref<1x256x4xbf16, #tpu.memory_space<vmem>>, %arg3: memref<1x256x4xbf16, #tpu.memory_space<vmem>>, %arg4: memref<1x256x4xbf16, #tpu.memory_space<vmem>>, %arg5: memref<4x8xbf16, #tpu.memory_space<vmem>>, %arg6: memref<1x8xf32, #tpu.memory_space<vmem>>, %arg7: memref<4x8xbf16, #tpu.memory_space<vmem>>, %arg8: memref<1x8xf32, #tpu.memory_space<vmem>>, %arg9: memref<4x8xbf16, #tpu.memory_space<vmem>>, %arg10: memref<1x8xf32, #tpu.memory_space<vmem>>, %arg11: memref<1x2x256x4xbf16, #tpu.memory_space<vmem>>, %arg12: memref<1x2x256x4xbf16, #tpu.memory_space<vmem>>, %arg13: memref<1x2x256x4xbf16, #tpu.memory_space<vmem>>) attributes {dimension_semantics = [#tpu.dimension_semantics<parallel>, #tpu.dimension_semantics<parallel>], iteration_bounds = array<i64: 2, 1>, scalar_prefetch = 0 : i64, scratch_operands = 0 : i64, tpu.core_type = #tpu.core_type<tc>, window_params = [{transform_indices = @transform_0, window_bounds = array<i64: 1, 256, 4>}, {transform_indices = @transform_1, window_bounds = array<i64: 1, 256, 4>}, {transform_indices = @transform_2, window_bounds = array<i64: 1, 256, 4>}, {pipeline_mode = #tpu.pipeline_mode<synchronous>, transform_indices = @transform_3, window_bounds = array<i64: 4, 8>}, {pipeline_mode = #tpu.pipeline_mode<synchronous>, transform_indices = @transform_4, window_bounds = array<i64: 1, 8>}, {pipeline_mode = #tpu.pipeline_mode<synchronous>, transform_indices = @transform_5, window_bounds = array<i64: 4, 8>}, {pipeline_mode = #tpu.pipeline_mode<synchronous>, transform_indices = @transform_6, window_bounds = array<i64: 1, 8>}, {pipeline_mode = #tpu.pipeline_mode<synchronous>, transform_indices = @transform_7, window_bounds = array<i64: 4, 8>}, {pipeline_mode = #tpu.pipeline_mode<synchronous>, transform_indices = @transform_8, window_bounds = array<i64: 1, 8>}, {transform_indices = @transform_9, window_bounds = array<i64: 1, 2, 256, 4>}, {transform_indices = @transform_10, window_bounds = array<i64: 1, 2, 256, 4>}, {transform_indices = @transform_11, window_bounds = array<i64: 1, 2, 256, 4>}]} {
    %c0 = arith.constant 0 : index
    %c0_0 = arith.constant 0 : index
    %c0_1 = arith.constant 0 : index
    %0 = vector.load %arg2[%c0, %c0_0, %c0_1] : memref<1x256x4xbf16, #tpu.memory_space<vmem>>, vector<1x256x4xbf16>
    %1 = vector.shape_cast %0 : vector<1x256x4xbf16> to vector<256x4xbf16>
    %c0_2 = arith.constant 0 : index
    %c0_3 = arith.constant 0 : index
    %2 = vector.load %arg5[%c0_2, %c0_3] : memref<4x8xbf16, #tpu.memory_space<vmem>>, vector<4x8xbf16>
    %cst = arith.constant dense<0.000000e+00> : vector<256x8xf32>
    %3 = tpu.matmul %1, %2, %cst {dimension_numbers = #tpu.dot_dimension_numbers<[1], [0], [0], [1], [0, 0, 1, 1], [], []>} : vector<256x4xbf16>, vector<4x8xbf16>, vector<256x8xf32> -> vector<256x8xf32>
    %c0_4 = arith.constant 0 : index
    %c0_5 = arith.constant 0 : index
    %4 = vector.load %arg6[%c0_4, %c0_5] : memref<1x8xf32, #tpu.memory_space<vmem>>, vector<1x8xf32>
    %5 = vector.broadcast %4 : vector<1x8xf32> to vector<256x8xf32>
    %6 = arith.addf %3, %5 : vector<256x8xf32>
    %cst_6 = arith.constant 0.353553385 : f32
    %7 = vector.broadcast %cst_6 : f32 to vector<256x8xf32>
    %8 = arith.mulf %6, %7 : vector<256x8xf32>
    %9 = arith.truncf %8 : vector<256x8xf32> to vector<256x8xbf16>
    %c0_7 = arith.constant 0 : index
    %c0_8 = arith.constant 0 : index
    %c0_9 = arith.constant 0 : index
    %10 = vector.load %arg3[%c0_7, %c0_8, %c0_9] : memref<1x256x4xbf16, #tpu.memory_space<vmem>>, vector<1x256x4xbf16>
    %11 = vector.shape_cast %10 : vector<1x256x4xbf16> to vector<256x4xbf16>
    %c0_10 = arith.constant 0 : index
    %c0_11 = arith.constant 0 : index
    %12 = vector.load %arg7[%c0_10, %c0_11] : memref<4x8xbf16, #tpu.memory_space<vmem>>, vector<4x8xbf16>
    %cst_12 = arith.constant dense<0.000000e+00> : vector<256x8xf32>
    %13 = tpu.matmul %11, %12, %cst_12 {dimension_numbers = #tpu.dot_dimension_numbers<[1], [0], [0], [1], [0, 0, 1, 1], [], []>} : vector<256x4xbf16>, vector<4x8xbf16>, vector<256x8xf32> -> vector<256x8xf32>
    %c0_13 = arith.constant 0 : index
    %c0_14 = arith.constant 0 : index
    %14 = vector.load %arg8[%c0_13, %c0_14] : memref<1x8xf32, #tpu.memory_space<vmem>>, vector<1x8xf32>
    %15 = vector.broadcast %14 : vector<1x8xf32> to vector<256x8xf32>
    %16 = arith.addf %13, %15 : vector<256x8xf32>
    %17 = arith.truncf %16 : vector<256x8xf32> to vector<256x8xbf16>
    %c0_15 = arith.constant 0 : index
    %c0_16 = arith.constant 0 : index
    %c0_17 = arith.constant 0 : index
    %18 = vector.load %arg4[%c0_15, %c0_16, %c0_17] : memref<1x256x4xbf16, #tpu.memory_space<vmem>>, vector<1x256x4xbf16>
    %19 = vector.shape_cast %18 : vector<1x256x4xbf16> to vector<256x4xbf16>
    %c0_18 = arith.constant 0 : index
    %c0_19 = arith.constant 0 : index
    %20 = vector.load %arg9[%c0_18, %c0_19] : memref<4x8xbf16, #tpu.memory_space<vmem>>, vector<4x8xbf16>
    %cst_20 = arith.constant dense<0.000000e+00> : vector<256x8xf32>
    %21 = tpu.matmul %19, %20, %cst_20 {dimension_numbers = #tpu.dot_dimension_numbers<[1], [0], [0], [1], [0, 0, 1, 1], [], []>} : vector<256x4xbf16>, vector<4x8xbf16>, vector<256x8xf32> -> vector<256x8xf32>
    %c0_21 = arith.constant 0 : index
    %c0_22 = arith.constant 0 : index
    %22 = vector.load %arg10[%c0_21, %c0_22] : memref<1x8xf32, #tpu.memory_space<vmem>>, vector<1x8xf32>
    %23 = vector.broadcast %22 : vector<1x8xf32> to vector<256x8xf32>
    %24 = arith.addf %21, %23 : vector<256x8xf32>
    %25 = arith.truncf %24 : vector<256x8xf32> to vector<256x8xbf16>
    %26 = vector.extract_strided_slice %9 {offsets = [0, 0], sizes = [256, 4], strides = [1, 1]} : vector<256x8xbf16> to vector<256x4xbf16>
    %c0_23 = arith.constant 0 : index
    %c0_24 = arith.constant 0 : index
    %c0_25 = arith.constant 0 : index
    %c0_26 = arith.constant 0 : index
    %27 = vector.load %arg11[%c0_23, %c0_24, %c0_25, %c0_26] : memref<1x2x256x4xbf16, #tpu.memory_space<vmem>>, vector<1x1x256x4xbf16>
    %28 = vector.shape_cast %27 : vector<1x1x256x4xbf16> to vector<256x4xbf16>
    %29 = vector.shape_cast %26 : vector<256x4xbf16> to vector<1x1x256x4xbf16>
    tpu.vector_store %arg11[%c0_23, %c0_24, %c0_25, %c0_26], %29 {strides = array<i32>} : memref<1x2x256x4xbf16, #tpu.memory_space<vmem>>, vector<1x1x256x4xbf16>,
    %30 = vector.extract_strided_slice %17 {offsets = [0, 0], sizes = [256, 4], strides = [1, 1]} : vector<256x8xbf16> to vector<256x4xbf16>
    %c0_27 = arith.constant 0 : index
    %c0_28 = arith.constant 0 : index
    %c0_29 = arith.constant 0 : index
    %c0_30 = arith.constant 0 : index
    %31 = vector.load %arg12[%c0_27, %c0_28, %c0_29, %c0_30] : memref<1x2x256x4xbf16, #tpu.memory_space<vmem>>, vector<1x1x256x4xbf16>
    %32 = vector.shape_cast %31 : vector<1x1x256x4xbf16> to vector<256x4xbf16>
    %33 = vector.shape_cast %30 : vector<256x4xbf16> to vector<1x1x256x4xbf16>
    tpu.vector_store %arg12[%c0_27, %c0_28, %c0_29, %c0_30], %33 {strides = array<i32>} : memref<1x2x256x4xbf16, #tpu.memory_space<vmem>>, vector<1x1x256x4xbf16>,
    %34 = vector.extract_strided_slice %25 {offsets = [0, 0], sizes = [256, 4], strides = [1, 1]} : vector<256x8xbf16> to vector<256x4xbf16>
    %c0_31 = arith.constant 0 : index
    %c0_32 = arith.constant 0 : index
    %c0_33 = arith.constant 0 : index
    %c0_34 = arith.constant 0 : index
    %35 = vector.load %arg13[%c0_31, %c0_32, %c0_33, %c0_34] : memref<1x2x256x4xbf16, #tpu.memory_space<vmem>>, vector<1x1x256x4xbf16>
    %36 = vector.shape_cast %35 : vector<1x1x256x4xbf16> to vector<256x4xbf16>
    %37 = vector.shape_cast %34 : vector<256x4xbf16> to vector<1x1x256x4xbf16>
    tpu.vector_store %arg13[%c0_31, %c0_32, %c0_33, %c0_34], %37 {strides = array<i32>} : memref<1x2x256x4xbf16, #tpu.memory_space<vmem>>, vector<1x1x256x4xbf16>,
    %38 = vector.extract_strided_slice %9 {offsets = [0, 4], sizes = [256, 4], strides = [1, 1]} : vector<256x8xbf16> to vector<256x4xbf16>
    %c0_35 = arith.constant 0 : index
    %c1 = arith.constant 1 : index
    %c0_36 = arith.constant 0 : index
    %c0_37 = arith.constant 0 : index
    %39 = vector.load %arg11[%c0_35, %c1, %c0_36, %c0_37] : memref<1x2x256x4xbf16, #tpu.memory_space<vmem>>, vector<1x1x256x4xbf16>
    %40 = vector.shape_cast %39 : vector<1x1x256x4xbf16> to vector<256x4xbf16>
    %41 = vector.shape_cast %38 : vector<256x4xbf16> to vector<1x1x256x4xbf16>
    tpu.vector_store %arg11[%c0_35, %c1, %c0_36, %c0_37], %41 {strides = array<i32>} : memref<1x2x256x4xbf16, #tpu.memory_space<vmem>>, vector<1x1x256x4xbf16>,
    %42 = vector.extract_strided_slice %17 {offsets = [0, 4], sizes = [256, 4], strides = [1, 1]} : vector<256x8xbf16> to vector<256x4xbf16>
    %c0_38 = arith.constant 0 : index
    %c1_39 = arith.constant 1 : index
    %c0_40 = arith.constant 0 : index
    %c0_41 = arith.constant 0 : index
    %43 = vector.load %arg12[%c0_38, %c1_39, %c0_40, %c0_41] : memref<1x2x256x4xbf16, #tpu.memory_space<vmem>>, vector<1x1x256x4xbf16>
    %44 = vector.shape_cast %43 : vector<1x1x256x4xbf16> to vector<256x4xbf16>
    %45 = vector.shape_cast %42 : vector<256x4xbf16> to vector<1x1x256x4xbf16>
    tpu.vector_store %arg12[%c0_38, %c1_39, %c0_40, %c0_41], %45 {strides = array<i32>} : memref<1x2x256x4xbf16, #tpu.memory_space<vmem>>, vector<1x1x256x4xbf16>,
    %46 = vector.extract_strided_slice %25 {offsets = [0, 4], sizes = [256, 4], strides = [1, 1]} : vector<256x8xbf16> to vector<256x4xbf16>
    %c0_42 = arith.constant 0 : index
    %c1_43 = arith.constant 1 : index
    %c0_44 = arith.constant 0 : index
    %c0_45 = arith.constant 0 : index
    %47 = vector.load %arg13[%c0_42, %c1_43, %c0_44, %c0_45] : memref<1x2x256x4xbf16, #tpu.memory_space<vmem>>, vector<1x1x256x4xbf16>
    %48 = vector.shape_cast %47 : vector<1x1x256x4xbf16> to vector<256x4xbf16>
    %49 = vector.shape_cast %46 : vector<256x4xbf16> to vector<1x1x256x4xbf16>
    tpu.vector_store %arg13[%c0_42, %c1_43, %c0_44, %c0_45], %49 {strides = array<i32>} : memref<1x2x256x4xbf16, #tpu.memory_space<vmem>>, vector<1x1x256x4xbf16>,
    return
  }
  func.func @transform_0(%arg0: i32, %arg1: i32) -> (i32, i32, i32) {
    %c0_i32 = arith.constant 0 : i32
    %c0_i32_0 = arith.constant 0 : i32
    return %arg0, %arg1, %c0_i32 : i32, i32, i32
  }
  func.func @transform_1(%arg0: i32, %arg1: i32) -> (i32, i32, i32) {
    %c0_i32 = arith.constant 0 : i32
    %c0_i32_0 = arith.constant 0 : i32
    return %arg0, %arg1, %c0_i32 : i32, i32, i32
  }
  func.func @transform_2(%arg0: i32, %arg1: i32) -> (i32, i32, i32) {
    %c0_i32 = arith.constant 0 : i32
    %c0_i32_0 = arith.constant 0 : i32
    return %arg0, %arg1, %c0_i32 : i32, i32, i32
  }
  func.func @transform_3(%arg0: i32, %arg1: i32) -> (i32, i32) {
    %c0_i32 = arith.constant 0 : i32
    %c0_i32_0 = arith.constant 0 : i32
    %c0_i32_1 = arith.constant 0 : i32
    return %c0_i32, %c0_i32_0 : i32, i32
  }
  func.func @transform_4(%arg0: i32, %arg1: i32) -> (i32, i32) {
    %c0_i32 = arith.constant 0 : i32
    %c0_i32_0 = arith.constant 0 : i32
    %c0_i32_1 = arith.constant 0 : i32
    return %c0_i32, %c0_i32_0 : i32, i32
  }
  func.func @transform_5(%arg0: i32, %arg1: i32) -> (i32, i32) {
    %c0_i32 = arith.constant 0 : i32
    %c0_i32_0 = arith.constant 0 : i32
    %c0_i32_1 = arith.constant 0 : i32
    return %c0_i32, %c0_i32_0 : i32, i32
  }
  func.func @transform_6(%arg0: i32, %arg1: i32) -> (i32, i32) {
    %c0_i32 = arith.constant 0 : i32
    %c0_i32_0 = arith.constant 0 : i32
    %c0_i32_1 = arith.constant 0 : i32
    return %c0_i32, %c0_i32_0 : i32, i32
  }
  func.func @transform_7(%arg0: i32, %arg1: i32) -> (i32, i32) {
    %c0_i32 = arith.constant 0 : i32
    %c0_i32_0 = arith.constant 0 : i32
    %c0_i32_1 = arith.constant 0 : i32
    return %c0_i32, %c0_i32_0 : i32, i32
  }
  func.func @transform_8(%arg0: i32, %arg1: i32) -> (i32, i32) {
    %c0_i32 = arith.constant 0 : i32
    %c0_i32_0 = arith.constant 0 : i32
    %c0_i32_1 = arith.constant 0 : i32
    return %c0_i32, %c0_i32_0 : i32, i32
  }
  func.func @transform_9(%arg0: i32, %arg1: i32) -> (i32, i32, i32, i32) {
    %c0_i32 = arith.constant 0 : i32
    %c0_i32_0 = arith.constant 0 : i32
    %c0_i32_1 = arith.constant 0 : i32
    return %arg0, %c0_i32, %arg1, %c0_i32_0 : i32, i32, i32, i32
  }
  func.func @transform_10(%arg0: i32, %arg1: i32) -> (i32, i32, i32, i32) {
    %c0_i32 = arith.constant 0 : i32
    %c0_i32_0 = arith.constant 0 : i32
    %c0_i32_1 = arith.constant 0 : i32
    return %arg0, %c0_i32, %arg1, %c0_i32_0 : i32, i32, i32, i32
  }
  func.func @transform_11(%arg0: i32, %arg1: i32) -> (i32, i32, i32, i32) {
    %c0_i32 = arith.constant 0 : i32
    %c0_i32_0 = arith.constant 0 : i32
    %c0_i32_1 = arith.constant 0 : i32
    return %arg0, %c0_i32, %arg1, %c0_i32_0 : i32, i32, i32, i32
  }
}

</mosaic_0001>

<llo_original>
// kernel: tpu_custom_call.1
$region0: #{tpu_custom_call.1}
  #allocation0 [shape = 'u32[]', space=smem, size = 0x4, offset = 0x4, fixed_abs, tag = 'smem constant byte address 0x4 - core index']
  #allocation1 [shape = 'u32[72,128]{1,0:T(1,128)}', space=vmem, size = 0x9000, scoped, tag = 'internal scratch']
  %s0 = inlined_call_operand.vmem [shape: bf16[2,256,4], index: 0, kind: input, shape index: {}]
  %s1 = inlined_call_operand.vmem [shape: bf16[2,256,4], index: 1, kind: input, shape index: {}]
  %s2 = inlined_call_operand.vmem [shape: bf16[2,256,4], index: 2, kind: input, shape index: {}]
  %s3 = inlined_call_operand.vmem [shape: bf16[4,8], index: 3, kind: input, shape index: {}]
  %s4 = inlined_call_operand.vmem [shape: f32[1,8], index: 4, kind: input, shape index: {}]
  %s5 = inlined_call_operand.vmem [shape: bf16[4,8], index: 5, kind: input, shape index: {}]
  %s6 = inlined_call_operand.vmem [shape: f32[1,8], index: 6, kind: input, shape index: {}]
  %s7 = inlined_call_operand.vmem [shape: bf16[4,8], index: 7, kind: input, shape index: {}]
  %s8 = inlined_call_operand.vmem [shape: f32[1,8], index: 8, kind: input, shape index: {}]
  %s9 = inlined_call_operand.vmem [shape: bf16[2,2,256,4], index: 9, kind: output, shape index: {0}]
  %s10 = inlined_call_operand.vmem [shape: bf16[2,2,256,4], index: 10, kind: output, shape index: {1}]
  %s11 = inlined_call_operand.vmem [shape: bf16[2,2,256,4], index: 11, kind: output, shape index: {2}]
  %12 = xla_tuple %s9, %s10, %s11
  %s13 = sld [smem:[#allocation0]]
  $region85: #{tpu_custom_call.1} parent=0
    _
  %s15 = ssub.s32 1, %s13
  %s16 = scalar_select 0, %s15, %s13
  loop: start=0, step=1, limit=4
  $region2: #{tpu_custom_call.1} parent=0 // loop_pre_header
    _
  $region3: #{tpu_custom_call.1} parent=0 // loop_header
    %s18 = sphi 0, %s22
    %p19 = scmp.ge.s32.totalorder %s18, 4
    %s25 = sphi 0, %s37
    %s26 = sphi 0, %s33
    %s27 = sphi 0, %s25
    %s28 = sphi 0, %s26
    %s29 = sphi 0, %s27
    %s30 = sphi 0, %s28
    %s42 = sphi 0, %s44
    %s45 = sphi 0, %s42
    %s46 = sphi 0, %s45
    %s62 = sphi 0, %s46
    %s70 = sphi 0, %s72
    %s73 = sphi 0, %s70
    %s74 = sphi 0, %s73
    %s90 = sphi 0, %s74
    %s98 = sphi 0, %s100
    %s101 = sphi 0, %s98
    %s102 = sphi 0, %s101
    %s118 = sphi 0, %s102
    %s122 = sphi 0, %s122
    %s124 = sphi 0, %s122
    %s125 = sphi 0, %s124
    %s139 = sphi 0, %s125
    %s143 = sphi 0, %s143
    %s145 = sphi 0, %s143
    %s146 = sphi 0, %s145
    %s160 = sphi 0, %s146
    %s164 = sphi 0, %s164
    %s166 = sphi 0, %s164
    %s167 = sphi 0, %s166
    %s181 = sphi 0, %s167
    %s185 = sphi 0, %s185
    %s187 = sphi 0, %s185
    %s188 = sphi 0, %s187
    %s202 = sphi 0, %s188
    %s206 = sphi 0, %s206
    %s208 = sphi 0, %s206
    %s209 = sphi 0, %s208
    %s223 = sphi 0, %s209
    %s227 = sphi 0, %s227
    %s229 = sphi 0, %s227
    %s230 = sphi 0, %s229
    %s244 = sphi 0, %s230
    %s252 = sphi 0, %s254
    %s255 = sphi 0, %s252
    %s256 = sphi 0, %s255
    %s272 = sphi 0, %s256
    %s280 = sphi 0, %s282
    %s283 = sphi 0, %s280
    %s284 = sphi 0, %s283
    %s300 = sphi 0, %s284
    %s308 = sphi 0, %s310
    %s311 = sphi 0, %s308
    %s312 = sphi 0, %s311
    %s328 = sphi 0, %s312
  $region4: #{tpu_custom_call.1} parent=0 // loop_header_branch
    %21 = sbr.rel (%p19) target = $region8
  $region5: #{tpu_custom_call.1} parent=0 // loop_body
    %s23 = ssub.s32 %s18, 1
    %s24 = ssub.s32 %s18, 2
    %s31 = sadd.s32 1, %s26
    %p32 = scmp.ge.s32.totalorder %s31, 1
    %s33 = scalar_select %p32, 0, %s31
    %s34 = sadd.s32 1, %s25
    %s35 = scalar_select %p32, %s34, %s25
    %p36 = scmp.ge.s32.totalorder %s35, 2
    %s37 = scalar_select %p36, 0, %s35
    %s38 = ssub.s32 %s25, %s37
    %s39 = ssub.s32 %s26, %s33
    %s40 = sor.u32 %s38, %s39
    %p41 = scmp.eq.s32.totalorder %s40, 0
    %s43 = sadd.s32 %s42, 1
    %s44 = scalar_select %p41, %s42, %s43
    %p47 = pneg %p41
    %p48 = scmp.eq.s32.totalorder %s18, 1
    %p49 = por %p47, %p48
    %p50 = scmp.ne.s32.totalorder %s42, %s45
    %p51 = scmp.eq.s32.totalorder %s18, 0
    %p52 = por %p50, %p51
    %p53 = scmp.ne.s32.totalorder %s42, %s45
    %p54 = scmp.eq.s32.totalorder %s23, 1
    %p55 = por %p53, %p54
    %p56 = scmp.ne.s32.totalorder %s45, %s46
    %p57 = scmp.eq.s32.totalorder %s23, 0
    %p58 = por %p56, %p57
    %p59 = scmp.ne.s32.totalorder %s45, %s46
    %p60 = scmp.eq.s32.totalorder %s24, 1
    %p61 = por %p59, %p60
    %p63 = scmp.ne.s32.totalorder %s46, %s62
    %p64 = scmp.eq.s32.totalorder %s24, 0
    %p65 = por %p63, %p64
    %s66 = ssub.s32 %s25, %s37
    %s67 = ssub.s32 %s26, %s33
    %s68 = sor.u32 %s66, %s67
    %p69 = scmp.eq.s32.totalorder %s68, 0
    %s71 = sadd.s32 %s70, 1
    %s72 = scalar_select %p69, %s70, %s71
    %p75 = pneg %p69
    %p76 = scmp.eq.s32.totalorder %s18, 1
    %p77 = por %p75, %p76
    %p78 = scmp.ne.s32.totalorder %s70, %s73
    %p79 = scmp.eq.s32.totalorder %s18, 0
    %p80 = por %p78, %p79
    %p81 = scmp.ne.s32.totalorder %s70, %s73
    %p82 = scmp.eq.s32.totalorder %s23, 1
    %p83 = por %p81, %p82
    %p84 = scmp.ne.s32.totalorder %s73, %s74
    %p85 = scmp.eq.s32.totalorder %s23, 0
    %p86 = por %p84, %p85
    %p87 = scmp.ne.s32.totalorder %s73, %s74
    %p88 = scmp.eq.s32.totalorder %s24, 1
    %p89 = por %p87, %p88
    %p91 = scmp.ne.s32.totalorder %s74, %s90
    %p92 = scmp.eq.s32.totalorder %s24, 0
    %p93 = por %p91, %p92
    %s94 = ssub.s32 %s25, %s37
    %s95 = ssub.s32 %s26, %s33
    %s96 = sor.u32 %s94, %s95
    %p97 = scmp.eq.s32.totalorder %s96, 0
    %s99 = sadd.s32 %s98, 1
    %s100 = scalar_select %p97, %s98, %s99
    %p103 = pneg %p97
    %p104 = scmp.eq.s32.totalorder %s18, 1
    %p105 = por %p103, %p104
    %p106 = scmp.ne.s32.totalorder %s98, %s101
    %p107 = scmp.eq.s32.totalorder %s18, 0
    %p108 = por %p106, %p107
    %p109 = scmp.ne.s32.totalorder %s98, %s101
    %p110 = scmp.eq.s32.totalorder %s23, 1
    %p111 = por %p109, %p110
    %p112 = scmp.ne.s32.totalorder %s101, %s102
    %p113 = scmp.eq.s32.totalorder %s23, 0
    %p114 = por %p112, %p113
    %p115 = scmp.ne.s32.totalorder %s101, %s102
    %p116 = scmp.eq.s32.totalorder %s24, 1
    %p117 = por %p115, %p116
    %p119 = scmp.ne.s32.totalorder %s102, %s118
    %p120 = scmp.eq.s32.totalorder %s24, 0
    %p121 = por %p119, %p120
    %s123 = sadd.s32 %s122, 1
    %p126 = scmp.eq.s32.totalorder %s18, 1
    %p127 = scmp.ne.s32.totalorder %s122, %s124
    %p128 = scmp.eq.s32.totalorder %s18, 0
    %p129 = por %p127, %p128
    %p130 = scmp.ne.s32.totalorder %s122, %s124
    %p131 = scmp.eq.s32.totalorder %s23, 1
    %p132 = por %p130, %p131
    %p133 = scmp.ne.s32.totalorder %s124, %s125
    %p134 = scmp.eq.s32.totalorder %s23, 0
    %p135 = por %p133, %p134
    %p136 = scmp.ne.s32.totalorder %s124, %s125
    %p137 = scmp.eq.s32.totalorder %s24, 1
    %p138 = por %p136, %p137
    %p140 = scmp.ne.s32.totalorder %s125, %s139
    %p141 = scmp.eq.s32.totalorder %s24, 0
    %p142 = por %p140, %p141
    %s144 = sadd.s32 %s143, 1
    %p147 = scmp.eq.s32.totalorder %s18, 1
    %p148 = scmp.ne.s32.totalorder %s143, %s145
    %p149 = scmp.eq.s32.totalorder %s18, 0
    %p150 = por %p148, %p149
    %p151 = scmp.ne.s32.totalorder %s143, %s145
    %p152 = scmp.eq.s32.totalorder %s23, 1
    %p153 = por %p151, %p152
    %p154 = scmp.ne.s32.totalorder %s145, %s146
    %p155 = scmp.eq.s32.totalorder %s23, 0
    %p156 = por %p154, %p155
    %p157 = scmp.ne.s32.totalorder %s145, %s146
    %p158 = scmp.eq.s32.totalorder %s24, 1
    %p159 = por %p157, %p158
    %p161 = scmp.ne.s32.totalorder %s146, %s160
    %p162 = scmp.eq.s32.totalorder %s24, 0
    %p163 = por %p161, %p162
    %s165 = sadd.s32 %s164, 1
    %p168 = scmp.eq.s32.totalorder %s18, 1
    %p169 = scmp.ne.s32.totalorder %s164, %s166
    %p170 = scmp.eq.s32.totalorder %s18, 0
    %p171 = por %p169, %p170
    %p172 = scmp.ne.s32.totalorder %s164, %s166
    %p173 = scmp.eq.s32.totalorder %s23, 1
    %p174 = por %p172, %p173
    %p175 = scmp.ne.s32.totalorder %s166, %s167
    %p176 = scmp.eq.s32.totalorder %s23, 0
    %p177 = por %p175, %p176
    %p178 = scmp.ne.s32.totalorder %s166, %s167
    %p179 = scmp.eq.s32.totalorder %s24, 1
    %p180 = por %p178, %p179
    %p182 = scmp.ne.s32.totalorder %s167, %s181
    %p183 = scmp.eq.s32.totalorder %s24, 0
    %p184 = por %p182, %p183
    %s186 = sadd.s32 %s185, 1
    %p189 = scmp.eq.s32.totalorder %s18, 1
    %p190 = scmp.ne.s32.totalorder %s185, %s187
    %p191 = scmp.eq.s32.totalorder %s18, 0
    %p192 = por %p190, %p191
    %p193 = scmp.ne.s32.totalorder %s185, %s187
    %p194 = scmp.eq.s32.totalorder %s23, 1
    %p195 = por %p193, %p194
    %p196 = scmp.ne.s32.totalorder %s187, %s188
    %p197 = scmp.eq.s32.totalorder %s23, 0
    %p198 = por %p196, %p197
    %p199 = scmp.ne.s32.totalorder %s187, %s188
    %p200 = scmp.eq.s32.totalorder %s24, 1
    %p201 = por %p199, %p200
    %p203 = scmp.ne.s32.totalorder %s188, %s202
    %p204 = scmp.eq.s32.totalorder %s24, 0
    %p205 = por %p203, %p204
    %s207 = sadd.s32 %s206, 1
    %p210 = scmp.eq.s32.totalorder %s18, 1
    %p211 = scmp.ne.s32.totalorder %s206, %s208
    %p212 = scmp.eq.s32.totalorder %s18, 0
    %p213 = por %p211, %p212
    %p214 = scmp.ne.s32.totalorder %s206, %s208
    %p215 = scmp.eq.s32.totalorder %s23, 1
    %p216 = por %p214, %p215
    %p217 = scmp.ne.s32.totalorder %s208, %s209
    %p218 = scmp.eq.s32.totalorder %s23, 0
    %p219 = por %p217, %p218
    %p220 = scmp.ne.s32.totalorder %s208, %s209
    %p221 = scmp.eq.s32.totalorder %s24, 1
    %p222 = por %p220, %p221
    %p224 = scmp.ne.s32.totalorder %s209, %s223
    %p225 = scmp.eq.s32.totalorder %s24, 0
    %p226 = por %p224, %p225
    %s228 = sadd.s32 %s227, 1
    %p231 = scmp.eq.s32.totalorder %s18, 1
    %p232 = scmp.ne.s32.totalorder %s227, %s229
    %p233 = scmp.eq.s32.totalorder %s18, 0
    %p234 = por %p232, %p233
    %p235 = scmp.ne.s32.totalorder %s227, %s229
    %p236 = scmp.eq.s32.totalorder %s23, 1
    %p237 = por %p235, %p236
    %p238 = scmp.ne.s32.totalorder %s229, %s230
    %p239 = scmp.eq.s32.totalorder %s23, 0
    %p240 = por %p238, %p239
    %p241 = scmp.ne.s32.totalorder %s229, %s230
    %p242 = scmp.eq.s32.totalorder %s24, 1
    %p243 = por %p241, %p242
    %p245 = scmp.ne.s32.totalorder %s230, %s244
    %p246 = scmp.eq.s32.totalorder %s24, 0
    %p247 = por %p245, %p246
    %s248 = ssub.s32 %s25, %s37
    %s249 = ssub.s32 %s26, %s33
    %s250 = sor.u32 %s248, %s249
    %p251 = scmp.eq.s32.totalorder %s250, 0
    %s253 = sadd.s32 %s252, 1
    %s254 = scalar_select %p251, %s252, %s253
    %p257 = pneg %p251
    %p258 = scmp.eq.s32.totalorder %s18, 1
    %p259 = por %p257, %p258
    %p260 = scmp.ne.s32.totalorder %s252, %s255
    %p261 = scmp.eq.s32.totalorder %s18, 0
    %p262 = por %p260, %p261
    %p263 = scmp.ne.s32.totalorder %s252, %s255
    %p264 = scmp.eq.s32.totalorder %s23, 1
    %p265 = por %p263, %p264
    %p266 = scmp.ne.s32.totalorder %s255, %s256
    %p267 = scmp.eq.s32.totalorder %s23, 0
    %p268 = por %p266, %p267
    %p269 = scmp.ne.s32.totalorder %s255, %s256
    %p270 = scmp.eq.s32.totalorder %s24, 1
    %p271 = por %p269, %p270
    %p273 = scmp.ne.s32.totalorder %s256, %s272
    %p274 = scmp.eq.s32.totalorder %s24, 0
    %p275 = por %p273, %p274
    %s276 = ssub.s32 %s25, %s37
    %s277 = ssub.s32 %s26, %s33
    %s278 = sor.u32 %s276, %s277
    %p279 = scmp.eq.s32.totalorder %s278, 0
    %s281 = sadd.s32 %s280, 1
    %s282 = scalar_select %p279, %s280, %s281
    %p285 = pneg %p279
    %p286 = scmp.eq.s32.totalorder %s18, 1
    %p287 = por %p285, %p286
    %p288 = scmp.ne.s32.totalorder %s280, %s283
    %p289 = scmp.eq.s32.totalorder %s18, 0
    %p290 = por %p288, %p289
    %p291 = scmp.ne.s32.totalorder %s280, %s283
    %p292 = scmp.eq.s32.totalorder %s23, 1
    %p293 = por %p291, %p292
    %p294 = scmp.ne.s32.totalorder %s283, %s284
    %p295 = scmp.eq.s32.totalorder %s23, 0
    %p296 = por %p294, %p295
    %p297 = scmp.ne.s32.totalorder %s283, %s284
    %p298 = scmp.eq.s32.totalorder %s24, 1
    %p299 = por %p297, %p298
    %p301 = scmp.ne.s32.totalorder %s284, %s300
    %p302 = scmp.eq.s32.totalorder %s24, 0
    %p303 = por %p301, %p302
    %s304 = ssub.s32 %s25, %s37
    %s305 = ssub.s32 %s26, %s33
    %s306 = sor.u32 %s304, %s305
    %p307 = scmp.eq.s32.totalorder %s306, 0
    %s309 = sadd.s32 %s308, 1
    %s310 = scalar_select %p307, %s308, %s309
    %p313 = pneg %p307
    %p314 = scmp.eq.s32.totalorder %s18, 1
    %p315 = por %p313, %p314
    %p316 = scmp.ne.s32.totalorder %s308, %s311
    %p317 = scmp.eq.s32.totalorder %s18, 0
    %p318 = por %p316, %p317
    %p319 = scmp.ne.s32.totalorder %s308, %s311
    %p320 = scmp.eq.s32.totalorder %s23, 1
    %p321 = por %p319, %p320
    %p322 = scmp.ne.s32.totalorder %s311, %s312
    %p323 = scmp.eq.s32.totalorder %s23, 0
    %p324 = por %p322, %p323
    %p325 = scmp.ne.s32.totalorder %s311, %s312
    %p326 = scmp.eq.s32.totalorder %s24, 1
    %p327 = por %p325, %p326
    %p329 = scmp.ne.s32.totalorder %s312, %s328
    %p330 = scmp.eq.s32.totalorder %s24, 0
    %p331 = por %p329, %p330
    %p332 = scmp.le.s32.totalorder 1, %s18
    %p333 = scmp.lt.s32.totalorder %s18, 3
    %p334 = pnand %p332, %p333
    %p335 = pneg %p334
    // Predicated region
    $region9: #{tpu_custom_call.1} parent=5 // pred_check
      _
    $region10: #{tpu_custom_call.1} parent=5 // pred_check_branch
      %337 = sbr.rel (%p334) target = $region12
    $region11: #{tpu_custom_call.1} parent=5 // pred_region
      %s338 = ssub.s32 %s18, 1
      // Predicated region
      $region13: #{tpu_custom_call.1} parent=11 // pred_check
        %p339 = pneg %p135
      $region14: #{tpu_custom_call.1} parent=11 // pred_check_branch
        %341 = sbr.rel (%p339) target = $region16
      $region15: #{tpu_custom_call.1} parent=11 // pred_region
        _
      $region16: #{tpu_custom_call.1} parent=11 // pred_fallthru
        _
      // Predicated region
      $region17: #{tpu_custom_call.1} parent=11 // pred_check
        %p342 = pneg %p156
      $region18: #{tpu_custom_call.1} parent=11 // pred_check_branch
        %344 = sbr.rel (%p342) target = $region20
      $region19: #{tpu_custom_call.1} parent=11 // pred_region
        _
      $region20: #{tpu_custom_call.1} parent=11 // pred_fallthru
        _
      // Predicated region
      $region21: #{tpu_custom_call.1} parent=11 // pred_check
        %p345 = pneg %p177
      $region22: #{tpu_custom_call.1} parent=11 // pred_check_branch
        %347 = sbr.rel (%p345) target = $region24
      $region23: #{tpu_custom_call.1} parent=11 // pred_region
        _
      $region24: #{tpu_custom_call.1} parent=11 // pred_fallthru
        _
      // Predicated region
      $region25: #{tpu_custom_call.1} parent=11 // pred_check
        %p348 = pneg %p198
      $region26: #{tpu_custom_call.1} parent=11 // pred_check_branch
        %350 = sbr.rel (%p348) target = $region28
      $region27: #{tpu_custom_call.1} parent=11 // pred_region
        _
      $region28: #{tpu_custom_call.1} parent=11 // pred_fallthru
        _
      // Predicated region
      $region29: #{tpu_custom_call.1} parent=11 // pred_check
        %p351 = pneg %p219
      $region30: #{tpu_custom_call.1} parent=11 // pred_check_branch
        %353 = sbr.rel (%p351) target = $region32
      $region31: #{tpu_custom_call.1} parent=11 // pred_region
        _
      $region32: #{tpu_custom_call.1} parent=11 // pred_fallthru
        _
      // Predicated region
      $region33: #{tpu_custom_call.1} parent=11 // pred_check
        %p354 = pneg %p240
      $region34: #{tpu_custom_call.1} parent=11 // pred_check_branch
        %356 = sbr.rel (%p354) target = $region36
      $region35: #{tpu_custom_call.1} parent=11 // pred_region
        _
      $region36: #{tpu_custom_call.1} parent=11 // pred_fallthru
        _
    $region12: #{tpu_custom_call.1} parent=5 // pred_fallthru
      _
    %p357 = scmp.lt.s32.totalorder %s18, 2
    // Predicated region
    $region37: #{tpu_custom_call.1} parent=5 // pred_check
      %p358 = pneg %p357
    $region38: #{tpu_custom_call.1} parent=5 // pred_check_branch
      %360 = sbr.rel (%p358) target = $region40
    $region39: #{tpu_custom_call.1} parent=5 // pred_region
      // Predicated region
      $region41: #{tpu_custom_call.1} parent=39 // pred_check
        %p361 = pneg %p52
      $region42: #{tpu_custom_call.1} parent=39 // pred_check_branch
        %363 = sbr.rel (%p361) target = $region44
      $region43: #{tpu_custom_call.1} parent=39 // pred_region
        %s364 = smul.u32 32, %s26
        %p365 = scmp.lt.s32.totalorder %s25, 1
        %s366 = scalar_select %p365, %s25, 1
        %p367 = scmp.lt.s32.totalorder %s364, 31
        %s368 = scalar_select %p367, %s364, 31
        %s369 = smul.addr %s366, 32
        %s370 = sadd.s32 %s368, %s369
        %s371 = smul.addr %s370, 4
        %s372 = scalar_lea.vmem %s0, %s371
        %s373 = smul.u32 32, %s26
      $region44: #{tpu_custom_call.1} parent=39 // pred_fallthru
        _
      // Predicated region
      $region45: #{tpu_custom_call.1} parent=39 // pred_check
        %p374 = pneg %p80
      $region46: #{tpu_custom_call.1} parent=39 // pred_check_branch
        %376 = sbr.rel (%p374) target = $region48
      $region47: #{tpu_custom_call.1} parent=39 // pred_region
        %s377 = smul.u32 32, %s26
        %p378 = scmp.lt.s32.totalorder %s25, 1
        %s379 = scalar_select %p378, %s25, 1
        %p380 = scmp.lt.s32.totalorder %s377, 31
        %s381 = scalar_select %p380, %s377, 31
        %s382 = smul.addr %s379, 32
        %s383 = sadd.s32 %s381, %s382
        %s384 = smul.addr %s383, 4
        %s385 = scalar_lea.vmem %s1, %s384
        %s386 = smul.u32 32, %s26
      $region48: #{tpu_custom_call.1} parent=39 // pred_fallthru
        _
      // Predicated region
      $region49: #{tpu_custom_call.1} parent=39 // pred_check
        %p387 = pneg %p108
      $region50: #{tpu_custom_call.1} parent=39 // pred_check_branch
        %389 = sbr.rel (%p387) target = $region52
      $region51: #{tpu_custom_call.1} parent=39 // pred_region
        %s390 = smul.u32 32, %s26
        %p391 = scmp.lt.s32.totalorder %s25, 1
        %s392 = scalar_select %p391, %s25, 1
        %p393 = scmp.lt.s32.totalorder %s390, 31
        %s394 = scalar_select %p393, %s390, 31
        %s395 = smul.addr %s392, 32
        %s396 = sadd.s32 %s394, %s395
        %s397 = smul.addr %s396, 4
        %s398 = scalar_lea.vmem %s2, %s397
        %s399 = smul.u32 32, %s26
      $region52: #{tpu_custom_call.1} parent=39 // pred_fallthru
        _
    $region40: #{tpu_custom_call.1} parent=5 // pred_fallthru
      _
    %p400 = scmp.le.s32.totalorder 1, %s18
    %p401 = scmp.lt.s32.totalorder %s18, 3
    %p402 = pnand %p400, %p401
    %p403 = pneg %p402
    // Predicated region
    $region53: #{tpu_custom_call.1} parent=5 // pred_check
      _
    $region54: #{tpu_custom_call.1} parent=5 // pred_check_branch
      %405 = sbr.rel (%p402) target = $region56
    $region55: #{tpu_custom_call.1} parent=5 // pred_region
      %s406 = ssub.s32 %s18, 1
      %s407 = smul.u32 32, %s28
      %p408 = scmp.lt.s32.totalorder %s27, 1
      %s409 = scalar_select %p408, %s27, 1
      %p410 = scmp.lt.s32.totalorder %s407, 31
      %s411 = scalar_select %p410, %s407, 31
      %s412 = smul.addr %s409, 32
      %s413 = sadd.s32 %s411, %s412
      %s414 = smul.addr %s413, 4
      %s415 = scalar_lea.vmem %s0, %s414
      %p416 = pneg %p58
      %p417 = pneg %p55
      %s418 = smul.u32 32, %s28
      %p419 = scmp.lt.s32.totalorder %s27, 1
      %s420 = scalar_select %p419, %s27, 1
      %p421 = scmp.lt.s32.totalorder %s418, 31
      %s422 = scalar_select %p421, %s418, 31
      %s423 = smul.addr %s420, 32
      %s424 = sadd.s32 %s422, %s423
      %s425 = smul.addr %s424, 4
      %s426 = scalar_lea.vmem %s1, %s425
      %p427 = pneg %p86
      %p428 = pneg %p83
      %s429 = smul.u32 32, %s28
      %p430 = scmp.lt.s32.totalorder %s27, 1
      %s431 = scalar_select %p430, %s27, 1
      %p432 = scmp.lt.s32.totalorder %s429, 31
      %s433 = scalar_select %p432, %s429, 31
      %s434 = smul.addr %s431, 32
      %s435 = sadd.s32 %s433, %s434
      %s436 = smul.addr %s435, 4
      %s437 = scalar_lea.vmem %s2, %s436
      %p438 = pneg %p114
      %p439 = pneg %p111
      %p440 = pneg %p135
      %p441 = pneg %p132
      %p442 = pneg %p156
      %p443 = pneg %p153
      %p444 = pneg %p177
      %p445 = pneg %p174
      %p446 = pneg %p198
      %p447 = pneg %p195
      %p448 = pneg %p219
      %p449 = pneg %p216
      %p450 = pneg %p240
      %p451 = pneg %p237
      %p452 = pneg %p268
      %p453 = pneg %p265
      %s454 = smul.u32 32, %s28
      %p455 = scmp.lt.s32.totalorder %s27, 1
      %s456 = scalar_select %p455, %s27, 1
      %p457 = scmp.lt.s32.totalorder %s454, 31
      %s458 = scalar_select %p457, %s454, 31
      %s459 = smul.addr %s456, 64
      %s460 = sadd.s32 %s458, %s459
      %s461 = smul.addr %s460, 4
      %s462 = scalar_lea.vmem %s9, %s461
      %p463 = pneg %p296
      %p464 = pneg %p293
      %s465 = smul.u32 32, %s28
      %p466 = scmp.lt.s32.totalorder %s27, 1
      %s467 = scalar_select %p466, %s27, 1
      %p468 = scmp.lt.s32.totalorder %s465, 31
      %s469 = scalar_select %p468, %s465, 31
      %s470 = smul.addr %s467, 64
      %s471 = sadd.s32 %s469, %s470
      %s472 = smul.addr %s471, 4
      %s473 = scalar_lea.vmem %s10, %s472
      %p474 = pneg %p324
      %p475 = pneg %p321
      %s476 = smul.u32 32, %s28
      %p477 = scmp.lt.s32.totalorder %s27, 1
      %s478 = scalar_select %p477, %s27, 1
      %p479 = scmp.lt.s32.totalorder %s476, 31
      %s480 = scalar_select %p479, %s476, 31
      %s481 = smul.addr %s478, 64
      %s482 = sadd.s32 %s480, %s481
      %s483 = smul.addr %s482, 4
      %s484 = scalar_lea.vmem %s11, %s483
      %s485 = smul.u32 32, %s28
      %p486 = scmp.lt.s32.totalorder %s27, 1
      %s487 = scalar_select %p486, %s27, 1
      %p488 = scmp.lt.s32.totalorder %s485, 31
      %s489 = scalar_select %p488, %s485, 31
      %s490 = smul.addr %s487, 32
      %s491 = sadd.s32 %s489, %s490
      %s492 = smul.addr %s491, 4
      %s493 = scalar_lea.vmem %s0, %s492
      %s494 = smul.u32 32, %s28
      %s495 = smul.u32 32, %s28
      %p496 = scmp.lt.s32.totalorder %s27, 1
      %s497 = scalar_select %p496, %s27, 1
      %p498 = scmp.lt.s32.totalorder %s495, 31
      %s499 = scalar_select %p498, %s495, 31
      %s500 = smul.addr %s497, 32
      %s501 = sadd.s32 %s499, %s500
      %s502 = smul.addr %s501, 4
      %s503 = scalar_lea.vmem %s1, %s502
      %s504 = smul.u32 32, %s28
      %s505 = smul.u32 32, %s28
      %p506 = scmp.lt.s32.totalorder %s27, 1
      %s507 = scalar_select %p506, %s27, 1
      %p508 = scmp.lt.s32.totalorder %s505, 31
      %s509 = scalar_select %p508, %s505, 31
      %s510 = smul.addr %s507, 32
      %s511 = sadd.s32 %s509, %s510
      %s512 = smul.addr %s511, 4
      %s513 = scalar_lea.vmem %s2, %s512
      %s514 = smul.u32 32, %s28
      %s515 = smul.u32 32, %s28
      %p516 = scmp.lt.s32.totalorder %s27, 1
      %s517 = scalar_select %p516, %s27, 1
      %p518 = scmp.lt.s32.totalorder %s515, 31
      %s519 = scalar_select %p518, %s515, 31
      %s520 = smul.addr %s517, 64
      %s521 = sadd.s32 %s519, %s520
      %s522 = smul.addr %s521, 4
      %s523 = scalar_lea.vmem %s9, %s522
      %s524 = smul.u32 32, %s28
      %s525 = smul.u32 32, %s28
      %p526 = scmp.lt.s32.totalorder %s27, 1
      %s527 = scalar_select %p526, %s27, 1
      %p528 = scmp.lt.s32.totalorder %s525, 31
      %s529 = scalar_select %p528, %s525, 31
      %s530 = smul.addr %s527, 64
      %s531 = sadd.s32 %s529, %s530
      %s532 = smul.addr %s531, 4
      %s533 = scalar_lea.vmem %s10, %s532
      %s534 = smul.u32 32, %s28
      %s535 = smul.u32 32, %s28
      %p536 = scmp.lt.s32.totalorder %s27, 1
      %s537 = scalar_select %p536, %s27, 1
      %p538 = scmp.lt.s32.totalorder %s535, 31
      %s539 = scalar_select %p538, %s535, 31
      %s540 = smul.addr %s537, 64
      %s541 = sadd.s32 %s539, %s540
      %s542 = smul.addr %s541, 4
      %s543 = scalar_lea.vmem %s11, %s542
      %s544 = smul.u32 32, %s28
      %v546 = vld [vmem:[%s493] sm:$0xf]
      %v547 = vld [vmem:[%s493 + $0x4] sm:$0xf]
      %v548 = vld [vmem:[%s493 + $0x8] sm:$0xf]
      %v549 = vld [vmem:[%s493 + $0xc] sm:$0xf]
      %v550 = vld [vmem:[%s493 + $0x10] sm:$0xf]
      %v551 = vld [vmem:[%s493 + $0x14] sm:$0xf]
      %v552 = vld [vmem:[%s493 + $0x18] sm:$0xf]
      %v553 = vld [vmem:[%s493 + $0x1c] sm:$0xf]
      %v554 = vld [vmem:[%s493 + $0x20] sm:$0xf]
      %v555 = vld [vmem:[%s493 + $0x24] sm:$0xf]
      %v556 = vld [vmem:[%s493 + $0x28] sm:$0xf]
      %v557 = vld [vmem:[%s493 + $0x2c] sm:$0xf]
      %v558 = vld [vmem:[%s493 + $0x30] sm:$0xf]
      %v559 = vld [vmem:[%s493 + $0x34] sm:$0xf]
      %v560 = vld [vmem:[%s493 + $0x38] sm:$0xf]
      %v561 = vld [vmem:[%s493 + $0x3c] sm:$0xf]
      %v562 = vld [vmem:[%s493 + $0x40] sm:$0xf]
      %v563 = vld [vmem:[%s493 + $0x44] sm:$0xf]
      %v564 = vld [vmem:[%s493 + $0x48] sm:$0xf]
      %v565 = vld [vmem:[%s493 + $0x4c] sm:$0xf]
      %v566 = vld [vmem:[%s493 + $0x50] sm:$0xf]
      %v567 = vld [vmem:[%s493 + $0x54] sm:$0xf]
      %v568 = vld [vmem:[%s493 + $0x58] sm:$0xf]
      %v569 = vld [vmem:[%s493 + $0x5c] sm:$0xf]
      %v570 = vld [vmem:[%s493 + $0x60] sm:$0xf]
      %v571 = vld [vmem:[%s493 + $0x64] sm:$0xf]
      %v572 = vld [vmem:[%s493 + $0x68] sm:$0xf]
      %v573 = vld [vmem:[%s493 + $0x6c] sm:$0xf]
      %v574 = vld [vmem:[%s493 + $0x70] sm:$0xf]
      %v575 = vld [vmem:[%s493 + $0x74] sm:$0xf]
      %v576 = vld [vmem:[%s493 + $0x78] sm:$0xf]
      %v577 = vld [vmem:[%s493 + $0x7c] sm:$0xf]
      %v578 = vld [vmem:[%s3] sm:$0x3]
      %v579 = vld [vmem:[%s4] sm:$0x1]
      %v581 = vperm.slane %v579, 0
      %v615 = vunpack.c.l.b16 %v546
      %v616 = vunpack.c.l.b16 %v547
      %v617 = vunpack.c.l.b16 %v548
      %v618 = vunpack.c.l.b16 %v549
      %v619 = vunpack.c.l.b16 %v550
      %v620 = vunpack.c.l.b16 %v551
      %v621 = vunpack.c.l.b16 %v552
      %v622 = vunpack.c.l.b16 %v553
      %v623 = vunpack.c.l.b16 %v554
      %v624 = vunpack.c.l.b16 %v555
      %v625 = vunpack.c.l.b16 %v556
      %v626 = vunpack.c.l.b16 %v557
      %v627 = vunpack.c.l.b16 %v558
      %v628 = vunpack.c.l.b16 %v559
      %v629 = vunpack.c.l.b16 %v560
      %v630 = vunpack.c.l.b16 %v561
      %v631 = vunpack.c.l.b16 %v562
      %v632 = vunpack.c.l.b16 %v563
      %v633 = vunpack.c.l.b16 %v564
      %v634 = vunpack.c.l.b16 %v565
      %v635 = vunpack.c.l.b16 %v566
      %v636 = vunpack.c.l.b16 %v567
      %v637 = vunpack.c.l.b16 %v568
      %v638 = vunpack.c.l.b16 %v569
      %v639 = vunpack.c.l.b16 %v570
      %v640 = vunpack.c.l.b16 %v571
      %v641 = vunpack.c.l.b16 %v572
      %v642 = vunpack.c.l.b16 %v573
      %v643 = vunpack.c.l.b16 %v574
      %v644 = vunpack.c.l.b16 %v575
      %v645 = vunpack.c.l.b16 %v576
      %v646 = vunpack.c.l.b16 %v577
      %v647 = vpack.c.b16 %v616, %v615
      %v648 = vpack.c.b16 %v618, %v617
      %v649 = vpack.c.b16 %v620, %v619
      %v650 = vpack.c.b16 %v622, %v621
      %v651 = vpack.c.b16 %v624, %v623
      %v652 = vpack.c.b16 %v626, %v625
      %v653 = vpack.c.b16 %v628, %v627
      %v654 = vpack.c.b16 %v630, %v629
      %v655 = vpack.c.b16 %v632, %v631
      %v656 = vpack.c.b16 %v634, %v633
      %v657 = vpack.c.b16 %v636, %v635
      %v658 = vpack.c.b16 %v638, %v637
      %v659 = vpack.c.b16 %v640, %v639
      %v660 = vpack.c.b16 %v642, %v641
      %v661 = vpack.c.b16 %v644, %v643
      %v662 = vpack.c.b16 %v646, %v645
      %vm663 = vcmask 31744
      %v665 = vsel %vm663, %v647, 0
      %v668 = vsel %vm663, %v648, 0
      %v671 = vsel %vm663, %v649, 0
      %v674 = vsel %vm663, %v650, 0
      %v677 = vsel %vm663, %v651, 0
      %v680 = vsel %vm663, %v652, 0
      %v683 = vsel %vm663, %v653, 0
      %v686 = vsel %vm663, %v654, 0
      %v689 = vsel %vm663, %v655, 0
      %v692 = vsel %vm663, %v656, 0
      %v695 = vsel %vm663, %v657, 0
      %v698 = vsel %vm663, %v658, 0
      %v701 = vsel %vm663, %v659, 0
      %v704 = vsel %vm663, %v660, 0
      %v707 = vsel %vm663, %v661, 0
      %v710 = vsel %vm663, %v662, 0
      %vm712 = vcmask 1041408
      %v714 = vsel %vm712, %v578, 0
      %716 = vmatpush.bf16.msra.mxu0 0
      %717 = vmatpush.bf16.msra.mxu0 0
      %718 = vmatpush.bf16.msra.mxu0 0
      %719 = vmatpush.bf16.msra.mxu0 0
      %720 = vmatpush.bf16.msra.mxu0 0
      %721 = vmatpush.bf16.msra.mxu0 0
      %722 = vmatpush.bf16.msra.mxu0 0
      %723 = vmatpush.bf16.msra.mxu0 %v714
      %724 = vmatmul.bf16.gmra.mxu0 %v665
      %v725 = vpop.f32.mrf.mxu0
      %v726 = vadd.f32 %v581, %v725
      %v727 = vpop.f32.mrf.mxu0
      %v728 = vadd.f32 %v581, %v727
      %729 = vmatmul.bf16.gmra.mxu0 %v668
      %v730 = vpop.f32.mrf.mxu0
      %v731 = vadd.f32 %v581, %v730
      %v732 = vpop.f32.mrf.mxu0
      %v733 = vadd.f32 %v581, %v732
      %734 = vmatmul.bf16.gmra.mxu0 %v671
      %v735 = vpop.f32.mrf.mxu0
      %v736 = vadd.f32 %v581, %v735
      %v737 = vpop.f32.mrf.mxu0
      %v738 = vadd.f32 %v581, %v737
      %739 = vmatmul.bf16.gmra.mxu0 %v674
      %v740 = vpop.f32.mrf.mxu0
      %v741 = vadd.f32 %v581, %v740
      %v742 = vpop.f32.mrf.mxu0
      %v743 = vadd.f32 %v581, %v742
      %744 = vmatmul.bf16.gmra.mxu0 %v677
      %v745 = vpop.f32.mrf.mxu0
      %v746 = vadd.f32 %v581, %v745
      %v747 = vpop.f32.mrf.mxu0
      %v748 = vadd.f32 %v581, %v747
      %749 = vmatmul.bf16.gmra.mxu0 %v680
      %v750 = vpop.f32.mrf.mxu0
      %v751 = vadd.f32 %v581, %v750
      %v752 = vpop.f32.mrf.mxu0
      %v753 = vadd.f32 %v581, %v752
      %754 = vmatmul.bf16.gmra.mxu0 %v683
      %v755 = vpop.f32.mrf.mxu0
      %v756 = vadd.f32 %v581, %v755
      %v757 = vpop.f32.mrf.mxu0
      %v758 = vadd.f32 %v581, %v757
      %759 = vmatmul.bf16.gmra.mxu0 %v686
      %v760 = vpop.f32.mrf.mxu0
      %v761 = vadd.f32 %v581, %v760
      %v762 = vpop.f32.mrf.mxu0
      %v763 = vadd.f32 %v581, %v762
      %764 = vmatmul.bf16.gmra.mxu0 %v689
      %v765 = vpop.f32.mrf.mxu0
      %v766 = vadd.f32 %v581, %v765
      %v767 = vpop.f32.mrf.mxu0
      %v768 = vadd.f32 %v581, %v767
      %769 = vmatmul.bf16.gmra.mxu0 %v692
      %v770 = vpop.f32.mrf.mxu0
      %v771 = vadd.f32 %v581, %v770
      %v772 = vpop.f32.mrf.mxu0
      %v773 = vadd.f32 %v581, %v772
      %774 = vmatmul.bf16.gmra.mxu0 %v695
      %v775 = vpop.f32.mrf.mxu0
      %v776 = vadd.f32 %v581, %v775
      %v777 = vpop.f32.mrf.mxu0
      %v778 = vadd.f32 %v581, %v777
      %779 = vmatmul.bf16.gmra.mxu0 %v698
      %v780 = vpop.f32.mrf.mxu0
      %v781 = vadd.f32 %v581, %v780
      %v782 = vpop.f32.mrf.mxu0
      %v783 = vadd.f32 %v581, %v782
      %784 = vmatmul.bf16.gmra.mxu0 %v701
      %v785 = vpop.f32.mrf.mxu0
      %v786 = vadd.f32 %v581, %v785
      %v787 = vpop.f32.mrf.mxu0
      %v788 = vadd.f32 %v581, %v787
      %789 = vmatmul.bf16.gmra.mxu0 %v704
      %v790 = vpop.f32.mrf.mxu0
      %v791 = vadd.f32 %v581, %v790
      %v792 = vpop.f32.mrf.mxu0
      %v793 = vadd.f32 %v581, %v792
      %794 = vmatmul.bf16.gmra.mxu0 %v707
      %v795 = vpop.f32.mrf.mxu0
      %v796 = vadd.f32 %v581, %v795
      %v797 = vpop.f32.mrf.mxu0
      %v798 = vadd.f32 %v581, %v797
      %799 = vmatmul.bf16.gmra.mxu0 %v710
      %v800 = vpop.f32.mrf.mxu0
      %v801 = vadd.f32 %v581, %v800
      %v802 = vpop.f32.mrf.mxu0
      %v803 = vadd.f32 %v581, %v802
      %804 = vdwg.mxu0
      %v805 = vmul.f32 %v726, 0.35355338
      %v806 = vmul.f32 %v728, 0.35355338
      %v807 = vmul.f32 %v731, 0.35355338
      %v808 = vmul.f32 %v733, 0.35355338
      %v809 = vmul.f32 %v736, 0.35355338
      %v810 = vmul.f32 %v738, 0.35355338
      %v811 = vmul.f32 %v741, 0.35355338
      %v812 = vmul.f32 %v743, 0.35355338
      %v813 = vmul.f32 %v746, 0.35355338
      %v814 = vmul.f32 %v748, 0.35355338
      %v815 = vmul.f32 %v751, 0.35355338
      %v816 = vmul.f32 %v753, 0.35355338
      %v817 = vmul.f32 %v756, 0.35355338
      %v818 = vmul.f32 %v758, 0.35355338
      %v819 = vmul.f32 %v761, 0.35355338
      %v820 = vmul.f32 %v763, 0.35355338
      %v821 = vmul.f32 %v766, 0.35355338
      %v822 = vmul.f32 %v768, 0.35355338
      %v823 = vmul.f32 %v771, 0.35355338
      %v824 = vmul.f32 %v773, 0.35355338
      %v825 = vmul.f32 %v776, 0.35355338
      %v826 = vmul.f32 %v778, 0.35355338
      %v827 = vmul.f32 %v781, 0.35355338
      %v828 = vmul.f32 %v783, 0.35355338
      %v829 = vmul.f32 %v786, 0.35355338
      %v830 = vmul.f32 %v788, 0.35355338
      %v831 = vmul.f32 %v791, 0.35355338
      %v832 = vmul.f32 %v793, 0.35355338
      %v833 = vmul.f32 %v796, 0.35355338
      %v834 = vmul.f32 %v798, 0.35355338
      %v835 = vmul.f32 %v801, 0.35355338
      %v836 = vmul.f32 %v803, 0.35355338
      %v837 = vpack.c.bf16 %v805, %v805
      %v838 = vpack.c.bf16 %v806, %v806
      %v839 = vpack.c.bf16 %v807, %v807
      %v840 = vpack.c.bf16 %v808, %v808
      %v841 = vpack.c.bf16 %v809, %v809
      %v842 = vpack.c.bf16 %v810, %v810
      %v843 = vpack.c.bf16 %v811, %v811
      %v844 = vpack.c.bf16 %v812, %v812
      %v845 = vpack.c.bf16 %v813, %v813
      %v846 = vpack.c.bf16 %v814, %v814
      %v847 = vpack.c.bf16 %v815, %v815
      %v848 = vpack.c.bf16 %v816, %v816
      %v849 = vpack.c.bf16 %v817, %v817
      %v850 = vpack.c.bf16 %v818, %v818
      %v851 = vpack.c.bf16 %v819, %v819
      %v852 = vpack.c.bf16 %v820, %v820
      %v853 = vpack.c.bf16 %v821, %v821
      %v854 = vpack.c.bf16 %v822, %v822
      %v855 = vpack.c.bf16 %v823, %v823
      %v856 = vpack.c.bf16 %v824, %v824
      %v857 = vpack.c.bf16 %v825, %v825
      %v858 = vpack.c.bf16 %v826, %v826
      %v859 = vpack.c.bf16 %v827, %v827
      %v860 = vpack.c.bf16 %v828, %v828
      %v861 = vpack.c.bf16 %v829, %v829
      %v862 = vpack.c.bf16 %v830, %v830
      %v863 = vpack.c.bf16 %v831, %v831
      %v864 = vpack.c.bf16 %v832, %v832
      %v865 = vpack.c.bf16 %v833, %v833
      %v866 = vpack.c.bf16 %v834, %v834
      %v867 = vpack.c.bf16 %v835, %v835
      %v868 = vpack.c.bf16 %v836, %v836
      %v869 = vld [vmem:[%s503] sm:$0xf]
      %v870 = vld [vmem:[%s503 + $0x4] sm:$0xf]
      %v871 = vld [vmem:[%s503 + $0x8] sm:$0xf]
      %v872 = vld [vmem:[%s503 + $0xc] sm:$0xf]
      %v873 = vld [vmem:[%s503 + $0x10] sm:$0xf]
      %v874 = vld [vmem:[%s503 + $0x14] sm:$0xf]
      %v875 = vld [vmem:[%s503 + $0x18] sm:$0xf]
      %v876 = vld [vmem:[%s503 + $0x1c] sm:$0xf]
      %v877 = vld [vmem:[%s503 + $0x20] sm:$0xf]
      %v878 = vld [vmem:[%s503 + $0x24] sm:$0xf]
      %v879 = vld [vmem:[%s503 + $0x28] sm:$0xf]
      %v880 = vld [vmem:[%s503 + $0x2c] sm:$0xf]
      %v881 = vld [vmem:[%s503 + $0x30] sm:$0xf]
      %v882 = vld [vmem:[%s503 + $0x34] sm:$0xf]
      %v883 = vld [vmem:[%s503 + $0x38] sm:$0xf]
      %v884 = vld [vmem:[%s503 + $0x3c] sm:$0xf]
      %v885 = vld [vmem:[%s503 + $0x40] sm:$0xf]
      %v886 = vld [vmem:[%s503 + $0x44] sm:$0xf]
      %v887 = vld [vmem:[%s503 + $0x48] sm:$0xf]
      %v888 = vld [vmem:[%s503 + $0x4c] sm:$0xf]
      %v889 = vld [vmem:[%s503 + $0x50] sm:$0xf]
      %v890 = vld [vmem:[%s503 + $0x54] sm:$0xf]
      %v891 = vld [vmem:[%s503 + $0x58] sm:$0xf]
      %v892 = vld [vmem:[%s503 + $0x5c] sm:$0xf]
      %v893 = vld [vmem:[%s503 + $0x60] sm:$0xf]
      %v894 = vld [vmem:[%s503 + $0x64] sm:$0xf]
      %v895 = vld [vmem:[%s503 + $0x68] sm:$0xf]
      %v896 = vld [vmem:[%s503 + $0x6c] sm:$0xf]
      %v897 = vld [vmem:[%s503 + $0x70] sm:$0xf]
      %v898 = vld [vmem:[%s503 + $0x74] sm:$0xf]
      %v899 = vld [vmem:[%s503 + $0x78] sm:$0xf]
      %v900 = vld [vmem:[%s503 + $0x7c] sm:$0xf]
      %v901 = vld [vmem:[%s5] sm:$0x3]
      %v902 = vld [vmem:[%s6] sm:$0x1]
      %v904 = vperm.slane %v902, 0
      %v938 = vunpack.c.l.b16 %v869
      %v939 = vunpack.c.l.b16 %v870
      %v940 = vunpack.c.l.b16 %v871
      %v941 = vunpack.c.l.b16 %v872
      %v942 = vunpack.c.l.b16 %v873
      %v943 = vunpack.c.l.b16 %v874
      %v944 = vunpack.c.l.b16 %v875
      %v945 = vunpack.c.l.b16 %v876
      %v946 = vunpack.c.l.b16 %v877
      %v947 = vunpack.c.l.b16 %v878
      %v948 = vunpack.c.l.b16 %v879
      %v949 = vunpack.c.l.b16 %v880
      %v950 = vunpack.c.l.b16 %v881
      %v951 = vunpack.c.l.b16 %v882
      %v952 = vunpack.c.l.b16 %v883
      %v953 = vunpack.c.l.b16 %v884
      %v954 = vunpack.c.l.b16 %v885
      %v955 = vunpack.c.l.b16 %v886
      %v956 = vunpack.c.l.b16 %v887
      %v957 = vunpack.c.l.b16 %v888
      %v958 = vunpack.c.l.b16 %v889
      %v959 = vunpack.c.l.b16 %v890
      %v960 = vunpack.c.l.b16 %v891
      %v961 = vunpack.c.l.b16 %v892
      %v962 = vunpack.c.l.b16 %v893
      %v963 = vunpack.c.l.b16 %v894
      %v964 = vunpack.c.l.b16 %v895
      %v965 = vunpack.c.l.b16 %v896
      %v966 = vunpack.c.l.b16 %v897
      %v967 = vunpack.c.l.b16 %v898
      %v968 = vunpack.c.l.b16 %v899
      %v969 = vunpack.c.l.b16 %v900
      %v970 = vpack.c.b16 %v939, %v938
      %v971 = vpack.c.b16 %v941, %v940
      %v972 = vpack.c.b16 %v943, %v942
      %v973 = vpack.c.b16 %v945, %v944
      %v974 = vpack.c.b16 %v947, %v946
      %v975 = vpack.c.b16 %v949, %v948
      %v976 = vpack.c.b16 %v951, %v950
      %v977 = vpack.c.b16 %v953, %v952
      %v978 = vpack.c.b16 %v955, %v954
      %v979 = vpack.c.b16 %v957, %v956
      %v980 = vpack.c.b16 %v959, %v958
      %v981 = vpack.c.b16 %v961, %v960
      %v982 = vpack.c.b16 %v963, %v962
      %v983 = vpack.c.b16 %v965, %v964
      %v984 = vpack.c.b16 %v967, %v966
      %v985 = vpack.c.b16 %v969, %v968
      %v987 = vsel %vm663, %v970, 0
      %v990 = vsel %vm663, %v971, 0
      %v993 = vsel %vm663, %v972, 0
      %v996 = vsel %vm663, %v973, 0
      %v999 = vsel %vm663, %v974, 0
      %v1002 = vsel %vm663, %v975, 0
      %v1005 = vsel %vm663, %v976, 0
      %v1008 = vsel %vm663, %v977, 0
      %v1011 = vsel %vm663, %v978, 0
      %v1014 = vsel %vm663, %v979, 0
      %v1017 = vsel %vm663, %v980, 0
      %v1020 = vsel %vm663, %v981, 0
      %v1023 = vsel %vm663, %v982, 0
      %v1026 = vsel %vm663, %v983, 0
      %v1029 = vsel %vm663, %v984, 0
      %v1032 = vsel %vm663, %v985, 0
      %v1035 = vsel %vm712, %v901, 0
      %1037 = vmatpush.bf16.msra.mxu0 0
      %1038 = vmatpush.bf16.msra.mxu0 0
      %1039 = vmatpush.bf16.msra.mxu0 0
      %1040 = vmatpush.bf16.msra.mxu0 0
      %1041 = vmatpush.bf16.msra.mxu0 0
      %1042 = vmatpush.bf16.msra.mxu0 0
      %1043 = vmatpush.bf16.msra.mxu0 0
      %1044 = vmatpush.bf16.msra.mxu0 %v1035
      %1045 = vmatmul.bf16.gmra.mxu0 %v987
      %v1046 = vpop.f32.mrf.mxu0
      %v1047 = vadd.f32 %v904, %v1046
      %v1048 = vpop.f32.mrf.mxu0
      %v1049 = vadd.f32 %v904, %v1048
      %1050 = vmatmul.bf16.gmra.mxu0 %v990
      %v1051 = vpop.f32.mrf.mxu0
      %v1052 = vadd.f32 %v904, %v1051
      %v1053 = vpop.f32.mrf.mxu0
      %v1054 = vadd.f32 %v904, %v1053
      %1055 = vmatmul.bf16.gmra.mxu0 %v993
      %v1056 = vpop.f32.mrf.mxu0
      %v1057 = vadd.f32 %v904, %v1056
      %v1058 = vpop.f32.mrf.mxu0
      %v1059 = vadd.f32 %v904, %v1058
      %1060 = vmatmul.bf16.gmra.mxu0 %v996
      %v1061 = vpop.f32.mrf.mxu0
      %v1062 = vadd.f32 %v904, %v1061
      %v1063 = vpop.f32.mrf.mxu0
      %v1064 = vadd.f32 %v904, %v1063
      %1065 = vmatmul.bf16.gmra.mxu0 %v999
      %v1066 = vpop.f32.mrf.mxu0
      %v1067 = vadd.f32 %v904, %v1066
      %v1068 = vpop.f32.mrf.mxu0
      %v1069 = vadd.f32 %v904, %v1068
      %1070 = vmatmul.bf16.gmra.mxu0 %v1002
      %v1071 = vpop.f32.mrf.mxu0
      %v1072 = vadd.f32 %v904, %v1071
      %v1073 = vpop.f32.mrf.mxu0
      %v1074 = vadd.f32 %v904, %v1073
      %1075 = vmatmul.bf16.gmra.mxu0 %v1005
      %v1076 = vpop.f32.mrf.mxu0
      %v1077 = vadd.f32 %v904, %v1076
      %v1078 = vpop.f32.mrf.mxu0
      %v1079 = vadd.f32 %v904, %v1078
      %1080 = vmatmul.bf16.gmra.mxu0 %v1008
      %v1081 = vpop.f32.mrf.mxu0
      %v1082 = vadd.f32 %v904, %v1081
      %v1083 = vpop.f32.mrf.mxu0
      %v1084 = vadd.f32 %v904, %v1083
      %1085 = vmatmul.bf16.gmra.mxu0 %v1011
      %v1086 = vpop.f32.mrf.mxu0
      %v1087 = vadd.f32 %v904, %v1086
      %v1088 = vpop.f32.mrf.mxu0
      %v1089 = vadd.f32 %v904, %v1088
      %1090 = vmatmul.bf16.gmra.mxu0 %v1014
      %v1091 = vpop.f32.mrf.mxu0
      %v1092 = vadd.f32 %v904, %v1091
      %v1093 = vpop.f32.mrf.mxu0
      %v1094 = vadd.f32 %v904, %v1093
      %1095 = vmatmul.bf16.gmra.mxu0 %v1017
      %v1096 = vpop.f32.mrf.mxu0
      %v1097 = vadd.f32 %v904, %v1096
      %v1098 = vpop.f32.mrf.mxu0
      %v1099 = vadd.f32 %v904, %v1098
      %1100 = vmatmul.bf16.gmra.mxu0 %v1020
      %v1101 = vpop.f32.mrf.mxu0
      %v1102 = vadd.f32 %v904, %v1101
      %v1103 = vpop.f32.mrf.mxu0
      %v1104 = vadd.f32 %v904, %v1103
      %1105 = vmatmul.bf16.gmra.mxu0 %v1023
      %v1106 = vpop.f32.mrf.mxu0
      %v1107 = vadd.f32 %v904, %v1106
      %v1108 = vpop.f32.mrf.mxu0
      %v1109 = vadd.f32 %v904, %v1108
      %1110 = vmatmul.bf16.gmra.mxu0 %v1026
      %v1111 = vpop.f32.mrf.mxu0
      %v1112 = vadd.f32 %v904, %v1111
      %v1113 = vpop.f32.mrf.mxu0
      %v1114 = vadd.f32 %v904, %v1113
      %1115 = vmatmul.bf16.gmra.mxu0 %v1029
      %v1116 = vpop.f32.mrf.mxu0
      %v1117 = vadd.f32 %v904, %v1116
      %v1118 = vpop.f32.mrf.mxu0
      %v1119 = vadd.f32 %v904, %v1118
      %1120 = vmatmul.bf16.gmra.mxu0 %v1032
      %v1121 = vpop.f32.mrf.mxu0
      %v1122 = vadd.f32 %v904, %v1121
      %v1123 = vpop.f32.mrf.mxu0
      %v1124 = vadd.f32 %v904, %v1123
      %1125 = vdwg.mxu0
      %v1126 = vpack.c.bf16 %v1047, %v1047
      %v1127 = vpack.c.bf16 %v1049, %v1049
      %v1128 = vpack.c.bf16 %v1052, %v1052
      %v1129 = vpack.c.bf16 %v1054, %v1054
      %v1130 = vpack.c.bf16 %v1057, %v1057
      %v1131 = vpack.c.bf16 %v1059, %v1059
      %v1132 = vpack.c.bf16 %v1062, %v1062
      %v1133 = vpack.c.bf16 %v1064, %v1064
      %v1134 = vpack.c.bf16 %v1067, %v1067
      %v1135 = vpack.c.bf16 %v1069, %v1069
      %v1136 = vpack.c.bf16 %v1072, %v1072
      %v1137 = vpack.c.bf16 %v1074, %v1074
      %v1138 = vpack.c.bf16 %v1077, %v1077
      %v1139 = vpack.c.bf16 %v1079, %v1079
      %v1140 = vpack.c.bf16 %v1082, %v1082
      %v1141 = vpack.c.bf16 %v1084, %v1084
      %v1142 = vpack.c.bf16 %v1087, %v1087
      %v1143 = vpack.c.bf16 %v1089, %v1089
      %v1144 = vpack.c.bf16 %v1092, %v1092
      %v1145 = vpack.c.bf16 %v1094, %v1094
      %v1146 = vpack.c.bf16 %v1097, %v1097
      %v1147 = vpack.c.bf16 %v1099, %v1099
      %v1148 = vpack.c.bf16 %v1102, %v1102
      %v1149 = vpack.c.bf16 %v1104, %v1104
      %v1150 = vpack.c.bf16 %v1107, %v1107
      %v1151 = vpack.c.bf16 %v1109, %v1109
      %v1152 = vpack.c.bf16 %v1112, %v1112
      %v1153 = vpack.c.bf16 %v1114, %v1114
      %v1154 = vpack.c.bf16 %v1117, %v1117
      %v1155 = vpack.c.bf16 %v1119, %v1119
      %v1156 = vpack.c.bf16 %v1122, %v1122
      %v1157 = vpack.c.bf16 %v1124, %v1124
      %v1158 = vld [vmem:[%s513] sm:$0xf]
      %v1159 = vld [vmem:[%s513 + $0x4] sm:$0xf]
      %v1160 = vld [vmem:[%s513 + $0x8] sm:$0xf]
      %v1161 = vld [vmem:[%s513 + $0xc] sm:$0xf]
      %v1162 = vld [vmem:[%s513 + $0x10] sm:$0xf]
      %v1163 = vld [vmem:[%s513 + $0x14] sm:$0xf]
      %v1164 = vld [vmem:[%s513 + $0x18] sm:$0xf]
      %v1165 = vld [vmem:[%s513 + $0x1c] sm:$0xf]
      %v1166 = vld [vmem:[%s513 + $0x20] sm:$0xf]
      %v1167 = vld [vmem:[%s513 + $0x24] sm:$0xf]
      %v1168 = vld [vmem:[%s513 + $0x28] sm:$0xf]
      %v1169 = vld [vmem:[%s513 + $0x2c] sm:$0xf]
      %v1170 = vld [vmem:[%s513 + $0x30] sm:$0xf]
      %v1171 = vld [vmem:[%s513 + $0x34] sm:$0xf]
      %v1172 = vld [vmem:[%s513 + $0x38] sm:$0xf]
      %v1173 = vld [vmem:[%s513 + $0x3c] sm:$0xf]
      %v1174 = vld [vmem:[%s513 + $0x40] sm:$0xf]
      %v1175 = vld [vmem:[%s513 + $0x44] sm:$0xf]
      %v1176 = vld [vmem:[%s513 + $0x48] sm:$0xf]
      %v1177 = vld [vmem:[%s513 + $0x4c] sm:$0xf]
      %v1178 = vld [vmem:[%s513 + $0x50] sm:$0xf]
      %v1179 = vld [vmem:[%s513 + $0x54] sm:$0xf]
      %v1180 = vld [vmem:[%s513 + $0x58] sm:$0xf]
      %v1181 = vld [vmem:[%s513 + $0x5c] sm:$0xf]
      %v1182 = vld [vmem:[%s513 + $0x60] sm:$0xf]
      %v1183 = vld [vmem:[%s513 + $0x64] sm:$0xf]
      %v1184 = vld [vmem:[%s513 + $0x68] sm:$0xf]
      %v1185 = vld [vmem:[%s513 + $0x6c] sm:$0xf]
      %v1186 = vld [vmem:[%s513 + $0x70] sm:$0xf]
      %v1187 = vld [vmem:[%s513 + $0x74] sm:$0xf]
      %v1188 = vld [vmem:[%s513 + $0x78] sm:$0xf]
      %v1189 = vld [vmem:[%s513 + $0x7c] sm:$0xf]
      %v1190 = vld [vmem:[%s7] sm:$0x3]
      %v1191 = vld [vmem:[%s8] sm:$0x1]
      %v1193 = vperm.slane %v1191, 0
      %v1227 = vunpack.c.l.b16 %v1158
      %v1228 = vunpack.c.l.b16 %v1159
      %v1229 = vunpack.c.l.b16 %v1160
      %v1230 = vunpack.c.l.b16 %v1161
      %v1231 = vunpack.c.l.b16 %v1162
      %v1232 = vunpack.c.l.b16 %v1163
      %v1233 = vunpack.c.l.b16 %v1164
      %v1234 = vunpack.c.l.b16 %v1165
      %v1235 = vunpack.c.l.b16 %v1166
      %v1236 = vunpack.c.l.b16 %v1167
      %v1237 = vunpack.c.l.b16 %v1168
      %v1238 = vunpack.c.l.b16 %v1169
      %v1239 = vunpack.c.l.b16 %v1170
      %v1240 = vunpack.c.l.b16 %v1171
      %v1241 = vunpack.c.l.b16 %v1172
      %v1242 = vunpack.c.l.b16 %v1173
      %v1243 = vunpack.c.l.b16 %v1174
      %v1244 = vunpack.c.l.b16 %v1175
      %v1245 = vunpack.c.l.b16 %v1176
      %v1246 = vunpack.c.l.b16 %v1177
      %v1247 = vunpack.c.l.b16 %v1178
      %v1248 = vunpack.c.l.b16 %v1179
      %v1249 = vunpack.c.l.b16 %v1180
      %v1250 = vunpack.c.l.b16 %v1181
      %v1251 = vunpack.c.l.b16 %v1182
      %v1252 = vunpack.c.l.b16 %v1183
      %v1253 = vunpack.c.l.b16 %v1184
      %v1254 = vunpack.c.l.b16 %v1185
      %v1255 = vunpack.c.l.b16 %v1186
      %v1256 = vunpack.c.l.b16 %v1187
      %v1257 = vunpack.c.l.b16 %v1188
      %v1258 = vunpack.c.l.b16 %v1189
      %v1259 = vpack.c.b16 %v1228, %v1227
      %v1260 = vpack.c.b16 %v1230, %v1229
      %v1261 = vpack.c.b16 %v1232, %v1231
      %v1262 = vpack.c.b16 %v1234, %v1233
      %v1263 = vpack.c.b16 %v1236, %v1235
      %v1264 = vpack.c.b16 %v1238, %v1237
      %v1265 = vpack.c.b16 %v1240, %v1239
      %v1266 = vpack.c.b16 %v1242, %v1241
      %v1267 = vpack.c.b16 %v1244, %v1243
      %v1268 = vpack.c.b16 %v1246, %v1245
      %v1269 = vpack.c.b16 %v1248, %v1247
      %v1270 = vpack.c.b16 %v1250, %v1249
      %v1271 = vpack.c.b16 %v1252, %v1251
      %v1272 = vpack.c.b16 %v1254, %v1253
      %v1273 = vpack.c.b16 %v1256, %v1255
      %v1274 = vpack.c.b16 %v1258, %v1257
      %v1276 = vsel %vm663, %v1259, 0
      %v1279 = vsel %vm663, %v1260, 0
      %v1282 = vsel %vm663, %v1261, 0
      %v1285 = vsel %vm663, %v1262, 0
      %v1288 = vsel %vm663, %v1263, 0
      %v1291 = vsel %vm663, %v1264, 0
      %v1294 = vsel %vm663, %v1265, 0
      %v1297 = vsel %vm663, %v1266, 0
      %v1300 = vsel %vm663, %v1267, 0
      %v1303 = vsel %vm663, %v1268, 0
      %v1306 = vsel %vm663, %v1269, 0
      %v1309 = vsel %vm663, %v1270, 0
      %v1312 = vsel %vm663, %v1271, 0
      %v1315 = vsel %vm663, %v1272, 0
      %v1318 = vsel %vm663, %v1273, 0
      %v1321 = vsel %vm663, %v1274, 0
      %v1324 = vsel %vm712, %v1190, 0
      %1326 = vmatpush.bf16.msra.mxu0 0
      %1327 = vmatpush.bf16.msra.mxu0 0
      %1328 = vmatpush.bf16.msra.mxu0 0
      %1329 = vmatpush.bf16.msra.mxu0 0
      %1330 = vmatpush.bf16.msra.mxu0 0
      %1331 = vmatpush.bf16.msra.mxu0 0
      %1332 = vmatpush.bf16.msra.mxu0 0
      %1333 = vmatpush.bf16.msra.mxu0 %v1324
      %1334 = vmatmul.bf16.gmra.mxu0 %v1276
      %v1335 = vpop.f32.mrf.mxu0
      %v1336 = vadd.f32 %v1193, %v1335
      %v1337 = vpop.f32.mrf.mxu0
      %v1338 = vadd.f32 %v1193, %v1337
      %1339 = vmatmul.bf16.gmra.mxu0 %v1279
      %v1340 = vpop.f32.mrf.mxu0
      %v1341 = vadd.f32 %v1193, %v1340
      %v1342 = vpop.f32.mrf.mxu0
      %v1343 = vadd.f32 %v1193, %v1342
      %1344 = vmatmul.bf16.gmra.mxu0 %v1282
      %v1345 = vpop.f32.mrf.mxu0
      %v1346 = vadd.f32 %v1193, %v1345
      %v1347 = vpop.f32.mrf.mxu0
      %v1348 = vadd.f32 %v1193, %v1347
      %1349 = vmatmul.bf16.gmra.mxu0 %v1285
      %v1350 = vpop.f32.mrf.mxu0
      %v1351 = vadd.f32 %v1193, %v1350
      %v1352 = vpop.f32.mrf.mxu0
      %v1353 = vadd.f32 %v1193, %v1352
      %1354 = vmatmul.bf16.gmra.mxu0 %v1288
      %v1355 = vpop.f32.mrf.mxu0
      %v1356 = vadd.f32 %v1193, %v1355
      %v1357 = vpop.f32.mrf.mxu0
      %v1358 = vadd.f32 %v1193, %v1357
      %1359 = vmatmul.bf16.gmra.mxu0 %v1291
      %v1360 = vpop.f32.mrf.mxu0
      %v1361 = vadd.f32 %v1193, %v1360
      %v1362 = vpop.f32.mrf.mxu0
      %v1363 = vadd.f32 %v1193, %v1362
      %1364 = vmatmul.bf16.gmra.mxu0 %v1294
      %v1365 = vpop.f32.mrf.mxu0
      %v1366 = vadd.f32 %v1193, %v1365
      %v1367 = vpop.f32.mrf.mxu0
      %v1368 = vadd.f32 %v1193, %v1367
      %1369 = vmatmul.bf16.gmra.mxu0 %v1297
      %v1370 = vpop.f32.mrf.mxu0
      %v1371 = vadd.f32 %v1193, %v1370
      %v1372 = vpop.f32.mrf.mxu0
      %v1373 = vadd.f32 %v1193, %v1372
      %1374 = vmatmul.bf16.gmra.mxu0 %v1300
      %v1375 = vpop.f32.mrf.mxu0
      %v1376 = vadd.f32 %v1193, %v1375
      %v1377 = vpop.f32.mrf.mxu0
      %v1378 = vadd.f32 %v1193, %v1377
      %1379 = vmatmul.bf16.gmra.mxu0 %v1303
      %v1380 = vpop.f32.mrf.mxu0
      %v1381 = vadd.f32 %v1193, %v1380
      %v1382 = vpop.f32.mrf.mxu0
      %v1383 = vadd.f32 %v1193, %v1382
      %1384 = vmatmul.bf16.gmra.mxu0 %v1306
      %v1385 = vpop.f32.mrf.mxu0
      %v1386 = vadd.f32 %v1193, %v1385
      %v1387 = vpop.f32.mrf.mxu0
      %v1388 = vadd.f32 %v1193, %v1387
      %1389 = vmatmul.bf16.gmra.mxu0 %v1309
      %v1390 = vpop.f32.mrf.mxu0
      %v1391 = vadd.f32 %v1193, %v1390
      %v1392 = vpop.f32.mrf.mxu0
      %v1393 = vadd.f32 %v1193, %v1392
      %1394 = vmatmul.bf16.gmra.mxu0 %v1312
      %v1395 = vpop.f32.mrf.mxu0
      %v1396 = vadd.f32 %v1193, %v1395
      %v1397 = vpop.f32.mrf.mxu0
      %v1398 = vadd.f32 %v1193, %v1397
      %1399 = vmatmul.bf16.gmra.mxu0 %v1315
      %v1400 = vpop.f32.mrf.mxu0
      %v1401 = vadd.f32 %v1193, %v1400
      %v1402 = vpop.f32.mrf.mxu0
      %v1403 = vadd.f32 %v1193, %v1402
      %1404 = vmatmul.bf16.gmra.mxu0 %v1318
      %v1405 = vpop.f32.mrf.mxu0
      %v1406 = vadd.f32 %v1193, %v1405
      %v1407 = vpop.f32.mrf.mxu0
      %v1408 = vadd.f32 %v1193, %v1407
      %1409 = vmatmul.bf16.gmra.mxu0 %v1321
      %v1410 = vpop.f32.mrf.mxu0
      %v1411 = vadd.f32 %v1193, %v1410
      %v1412 = vpop.f32.mrf.mxu0
      %v1413 = vadd.f32 %v1193, %v1412
      %1414 = vdwg.mxu0
      %v1415 = vpack.c.bf16 %v1336, %v1336
      %v1416 = vpack.c.bf16 %v1338, %v1338
      %v1417 = vpack.c.bf16 %v1341, %v1341
      %v1418 = vpack.c.bf16 %v1343, %v1343
      %v1419 = vpack.c.bf16 %v1346, %v1346
      %v1420 = vpack.c.bf16 %v1348, %v1348
      %v1421 = vpack.c.bf16 %v1351, %v1351
      %v1422 = vpack.c.bf16 %v1353, %v1353
      %v1423 = vpack.c.bf16 %v1356, %v1356
      %v1424 = vpack.c.bf16 %v1358, %v1358
      %v1425 = vpack.c.bf16 %v1361, %v1361
      %v1426 = vpack.c.bf16 %v1363, %v1363
      %v1427 = vpack.c.bf16 %v1366, %v1366
      %v1428 = vpack.c.bf16 %v1368, %v1368
      %v1429 = vpack.c.bf16 %v1371, %v1371
      %v1430 = vpack.c.bf16 %v1373, %v1373
      %v1431 = vpack.c.bf16 %v1376, %v1376
      %v1432 = vpack.c.bf16 %v1378, %v1378
      %v1433 = vpack.c.bf16 %v1381, %v1381
      %v1434 = vpack.c.bf16 %v1383, %v1383
      %v1435 = vpack.c.bf16 %v1386, %v1386
      %v1436 = vpack.c.bf16 %v1388, %v1388
      %v1437 = vpack.c.bf16 %v1391, %v1391
      %v1438 = vpack.c.bf16 %v1393, %v1393
      %v1439 = vpack.c.bf16 %v1396, %v1396
      %v1440 = vpack.c.bf16 %v1398, %v1398
      %v1441 = vpack.c.bf16 %v1401, %v1401
      %v1442 = vpack.c.bf16 %v1403, %v1403
      %v1443 = vpack.c.bf16 %v1406, %v1406
      %v1444 = vpack.c.bf16 %v1408, %v1408
      %v1445 = vpack.c.bf16 %v1411, %v1411
      %v1446 = vpack.c.bf16 %v1413, %v1413
      %vm1447 = vcmask 27648
      %1448 = vst.msk [vmem:[%s523] sm:$0xf] %vm1447, %v837
      %1449 = vst.msk [vmem:[%s523 + $0x4] sm:$0xf] %vm1447, %v838
      %1450 = vst.msk [vmem:[%s523 + $0x8] sm:$0xf] %vm1447, %v839
      %1451 = vst.msk [vmem:[%s523 + $0xc] sm:$0xf] %vm1447, %v840
      %1452 = vst.msk [vmem:[%s523 + $0x10] sm:$0xf] %vm1447, %v841
      %1453 = vst.msk [vmem:[%s523 + $0x14] sm:$0xf] %vm1447, %v842
      %1454 = vst.msk [vmem:[%s523 + $0x18] sm:$0xf] %vm1447, %v843
      %1455 = vst.msk [vmem:[%s523 + $0x1c] sm:$0xf] %vm1447, %v844
      %1456 = vst.msk [vmem:[%s523 + $0x20] sm:$0xf] %vm1447, %v845
      %1457 = vst.msk [vmem:[%s523 + $0x24] sm:$0xf] %vm1447, %v846
      %1458 = vst.msk [vmem:[%s523 + $0x28] sm:$0xf] %vm1447, %v847
      %1459 = vst.msk [vmem:[%s523 + $0x2c] sm:$0xf] %vm1447, %v848
      %1460 = vst.msk [vmem:[%s523 + $0x30] sm:$0xf] %vm1447, %v849
      %1461 = vst.msk [vmem:[%s523 + $0x34] sm:$0xf] %vm1447, %v850
      %1462 = vst.msk [vmem:[%s523 + $0x38] sm:$0xf] %vm1447, %v851
      %1463 = vst.msk [vmem:[%s523 + $0x3c] sm:$0xf] %vm1447, %v852
      %1464 = vst.msk [vmem:[%s523 + $0x40] sm:$0xf] %vm1447, %v853
      %1465 = vst.msk [vmem:[%s523 + $0x44] sm:$0xf] %vm1447, %v854
      %1466 = vst.msk [vmem:[%s523 + $0x48] sm:$0xf] %vm1447, %v855
      %1467 = vst.msk [vmem:[%s523 + $0x4c] sm:$0xf] %vm1447, %v856
      %1468 = vst.msk [vmem:[%s523 + $0x50] sm:$0xf] %vm1447, %v857
      %1469 = vst.msk [vmem:[%s523 + $0x54] sm:$0xf] %vm1447, %v858
      %1470 = vst.msk [vmem:[%s523 + $0x58] sm:$0xf] %vm1447, %v859
      %1471 = vst.msk [vmem:[%s523 + $0x5c] sm:$0xf] %vm1447, %v860
      %1472 = vst.msk [vmem:[%s523 + $0x60] sm:$0xf] %vm1447, %v861
      %1473 = vst.msk [vmem:[%s523 + $0x64] sm:$0xf] %vm1447, %v862
      %1474 = vst.msk [vmem:[%s523 + $0x68] sm:$0xf] %vm1447, %v863
      %1475 = vst.msk [vmem:[%s523 + $0x6c] sm:$0xf] %vm1447, %v864
      %1476 = vst.msk [vmem:[%s523 + $0x70] sm:$0xf] %vm1447, %v865
      %1477 = vst.msk [vmem:[%s523 + $0x74] sm:$0xf] %vm1447, %v866
      %1478 = vst.msk [vmem:[%s523 + $0x78] sm:$0xf] %vm1447, %v867
      %1479 = vst.msk [vmem:[%s523 + $0x7c] sm:$0xf] %vm1447, %v868
      %1480 = vst.msk [vmem:[%s533] sm:$0xf] %vm1447, %v1126
      %1481 = vst.msk [vmem:[%s533 + $0x4] sm:$0xf] %vm1447, %v1127
      %1482 = vst.msk [vmem:[%s533 + $0x8] sm:$0xf] %vm1447, %v1128
      %1483 = vst.msk [vmem:[%s533 + $0xc] sm:$0xf] %vm1447, %v1129
      %1484 = vst.msk [vmem:[%s533 + $0x10] sm:$0xf] %vm1447, %v1130
      %1485 = vst.msk [vmem:[%s533 + $0x14] sm:$0xf] %vm1447, %v1131
      %1486 = vst.msk [vmem:[%s533 + $0x18] sm:$0xf] %vm1447, %v1132
      %1487 = vst.msk [vmem:[%s533 + $0x1c] sm:$0xf] %vm1447, %v1133
      %1488 = vst.msk [vmem:[%s533 + $0x20] sm:$0xf] %vm1447, %v1134
      %1489 = vst.msk [vmem:[%s533 + $0x24] sm:$0xf] %vm1447, %v1135
      %1490 = vst.msk [vmem:[%s533 + $0x28] sm:$0xf] %vm1447, %v1136
      %1491 = vst.msk [vmem:[%s533 + $0x2c] sm:$0xf] %vm1447, %v1137
      %1492 = vst.msk [vmem:[%s533 + $0x30] sm:$0xf] %vm1447, %v1138
      %1493 = vst.msk [vmem:[%s533 + $0x34] sm:$0xf] %vm1447, %v1139
      %1494 = vst.msk [vmem:[%s533 + $0x38] sm:$0xf] %vm1447, %v1140
      %1495 = vst.msk [vmem:[%s533 + $0x3c] sm:$0xf] %vm1447, %v1141
      %1496 = vst.msk [vmem:[%s533 + $0x40] sm:$0xf] %vm1447, %v1142
      %1497 = vst.msk [vmem:[%s533 + $0x44] sm:$0xf] %vm1447, %v1143
      %1498 = vst.msk [vmem:[%s533 + $0x48] sm:$0xf] %vm1447, %v1144
      %1499 = vst.msk [vmem:[%s533 + $0x4c] sm:$0xf] %vm1447, %v1145
      %1500 = vst.msk [vmem:[%s533 + $0x50] sm:$0xf] %vm1447, %v1146
      %1501 = vst.msk [vmem:[%s533 + $0x54] sm:$0xf] %vm1447, %v1147
      %1502 = vst.msk [vmem:[%s533 + $0x58] sm:$0xf] %vm1447, %v1148
      %1503 = vst.msk [vmem:[%s533 + $0x5c] sm:$0xf] %vm1447, %v1149
      %1504 = vst.msk [vmem:[%s533 + $0x60] sm:$0xf] %vm1447, %v1150
      %1505 = vst.msk [vmem:[%s533 + $0x64] sm:$0xf] %vm1447, %v1151
      %1506 = vst.msk [vmem:[%s533 + $0x68] sm:$0xf] %vm1447, %v1152
      %1507 = vst.msk [vmem:[%s533 + $0x6c] sm:$0xf] %vm1447, %v1153
      %1508 = vst.msk [vmem:[%s533 + $0x70] sm:$0xf] %vm1447, %v1154
      %1509 = vst.msk [vmem:[%s533 + $0x74] sm:$0xf] %vm1447, %v1155
      %1510 = vst.msk [vmem:[%s533 + $0x78] sm:$0xf] %vm1447, %v1156
      %1511 = vst.msk [vmem:[%s533 + $0x7c] sm:$0xf] %vm1447, %v1157
      %1512 = vst.msk [vmem:[%s543] sm:$0xf] %vm1447, %v1415
      %1513 = vst.msk [vmem:[%s543 + $0x4] sm:$0xf] %vm1447, %v1416
      %1514 = vst.msk [vmem:[%s543 + $0x8] sm:$0xf] %vm1447, %v1417
      %1515 = vst.msk [vmem:[%s543 + $0xc] sm:$0xf] %vm1447, %v1418
      %1516 = vst.msk [vmem:[%s543 + $0x10] sm:$0xf] %vm1447, %v1419
      %1517 = vst.msk [vmem:[%s543 + $0x14] sm:$0xf] %vm1447, %v1420
      %1518 = vst.msk [vmem:[%s543 + $0x18] sm:$0xf] %vm1447, %v1421
      %1519 = vst.msk [vmem:[%s543 + $0x1c] sm:$0xf] %vm1447, %v1422
      %1520 = vst.msk [vmem:[%s543 + $0x20] sm:$0xf] %vm1447, %v1423
      %1521 = vst.msk [vmem:[%s543 + $0x24] sm:$0xf] %vm1447, %v1424
      %1522 = vst.msk [vmem:[%s543 + $0x28] sm:$0xf] %vm1447, %v1425
      %1523 = vst.msk [vmem:[%s543 + $0x2c] sm:$0xf] %vm1447, %v1426
      %1524 = vst.msk [vmem:[%s543 + $0x30] sm:$0xf] %vm1447, %v1427
      %1525 = vst.msk [vmem:[%s543 + $0x34] sm:$0xf] %vm1447, %v1428
      %1526 = vst.msk [vmem:[%s543 + $0x38] sm:$0xf] %vm1447, %v1429
      %1527 = vst.msk [vmem:[%s543 + $0x3c] sm:$0xf] %vm1447, %v1430
      %1528 = vst.msk [vmem:[%s543 + $0x40] sm:$0xf] %vm1447, %v1431
      %1529 = vst.msk [vmem:[%s543 + $0x44] sm:$0xf] %vm1447, %v1432
      %1530 = vst.msk [vmem:[%s543 + $0x48] sm:$0xf] %vm1447, %v1433
      %1531 = vst.msk [vmem:[%s543 + $0x4c] sm:$0xf] %vm1447, %v1434
      %1532 = vst.msk [vmem:[%s543 + $0x50] sm:$0xf] %vm1447, %v1435
      %1533 = vst.msk [vmem:[%s543 + $0x54] sm:$0xf] %vm1447, %v1436
      %1534 = vst.msk [vmem:[%s543 + $0x58] sm:$0xf] %vm1447, %v1437
      %1535 = vst.msk [vmem:[%s543 + $0x5c] sm:$0xf] %vm1447, %v1438
      %1536 = vst.msk [vmem:[%s543 + $0x60] sm:$0xf] %vm1447, %v1439
      %1537 = vst.msk [vmem:[%s543 + $0x64] sm:$0xf] %vm1447, %v1440
      %1538 = vst.msk [vmem:[%s543 + $0x68] sm:$0xf] %vm1447, %v1441
      %1539 = vst.msk [vmem:[%s543 + $0x6c] sm:$0xf] %vm1447, %v1442
      %1540 = vst.msk [vmem:[%s543 + $0x70] sm:$0xf] %vm1447, %v1443
      %1541 = vst.msk [vmem:[%s543 + $0x74] sm:$0xf] %vm1447, %v1444
      %1542 = vst.msk [vmem:[%s543 + $0x78] sm:$0xf] %vm1447, %v1445
      %1543 = vst.msk [vmem:[%s543 + $0x7c] sm:$0xf] %vm1447, %v1446
      %1576 = vrot.lane.b32.xlu0 %v837, 124
      %v1577 = vpop.permute.xlu0 %1576
      %1578 = vrot.lane.b32.xlu0 %v838, 124
      %v1579 = vpop.permute.xlu0 %1578
      %1580 = vrot.lane.b32.xlu0 %v839, 124
      %v1581 = vpop.permute.xlu0 %1580
      %1582 = vrot.lane.b32.xlu0 %v840, 124
      %v1583 = vpop.permute.xlu0 %1582
      %1584 = vrot.lane.b32.xlu0 %v841, 124
      %v1585 = vpop.permute.xlu0 %1584
      %1586 = vrot.lane.b32.xlu0 %v842, 124
      %v1587 = vpop.permute.xlu0 %1586
      %1588 = vrot.lane.b32.xlu0 %v843, 124
      %v1589 = vpop.permute.xlu0 %1588
      %1590 = vrot.lane.b32.xlu0 %v844, 124
      %v1591 = vpop.permute.xlu0 %1590
      %1592 = vrot.lane.b32.xlu0 %v845, 124
      %v1593 = vpop.permute.xlu0 %1592
      %1594 = vrot.lane.b32.xlu0 %v846, 124
      %v1595 = vpop.permute.xlu0 %1594
      %1596 = vrot.lane.b32.xlu0 %v847, 124
      %v1597 = vpop.permute.xlu0 %1596
      %1598 = vrot.lane.b32.xlu0 %v848, 124
      %v1599 = vpop.permute.xlu0 %1598
      %1600 = vrot.lane.b32.xlu0 %v849, 124
      %v1601 = vpop.permute.xlu0 %1600
      %1602 = vrot.lane.b32.xlu0 %v850, 124
      %v1603 = vpop.permute.xlu0 %1602
      %1604 = vrot.lane.b32.xlu0 %v851, 124
      %v1605 = vpop.permute.xlu0 %1604
      %1606 = vrot.lane.b32.xlu0 %v852, 124
      %v1607 = vpop.permute.xlu0 %1606
      %1608 = vrot.lane.b32.xlu0 %v853, 124
      %v1609 = vpop.permute.xlu0 %1608
      %1610 = vrot.lane.b32.xlu0 %v854, 124
      %v1611 = vpop.permute.xlu0 %1610
      %1612 = vrot.lane.b32.xlu0 %v855, 124
      %v1613 = vpop.permute.xlu0 %1612
      %1614 = vrot.lane.b32.xlu0 %v856, 124
      %v1615 = vpop.permute.xlu0 %1614
      %1616 = vrot.lane.b32.xlu0 %v857, 124
      %v1617 = vpop.permute.xlu0 %1616
      %1618 = vrot.lane.b32.xlu0 %v858, 124
      %v1619 = vpop.permute.xlu0 %1618
      %1620 = vrot.lane.b32.xlu0 %v859, 124
      %v1621 = vpop.permute.xlu0 %1620
      %1622 = vrot.lane.b32.xlu0 %v860, 124
      %v1623 = vpop.permute.xlu0 %1622
      %1624 = vrot.lane.b32.xlu0 %v861, 124
      %v1625 = vpop.permute.xlu0 %1624
      %1626 = vrot.lane.b32.xlu0 %v862, 124
      %v1627 = vpop.permute.xlu0 %1626
      %1628 = vrot.lane.b32.xlu0 %v863, 124
      %v1629 = vpop.permute.xlu0 %1628
      %1630 = vrot.lane.b32.xlu0 %v864, 124
      %v1631 = vpop.permute.xlu0 %1630
      %1632 = vrot.lane.b32.xlu0 %v865, 124
      %v1633 = vpop.permute.xlu0 %1632
      %1634 = vrot.lane.b32.xlu0 %v866, 124
      %v1635 = vpop.permute.xlu0 %1634
      %1636 = vrot.lane.b32.xlu0 %v867, 124
      %v1637 = vpop.permute.xlu0 %1636
      %1638 = vrot.lane.b32.xlu0 %v868, 124
      %v1639 = vpop.permute.xlu0 %1638
      %s1672 = scalar_lea.vmem %s523, 128
      %1673 = vst.msk [vmem:[%s1672] sm:$0xf] %vm1447, %v1577
      %1674 = vst.msk [vmem:[%s1672 + $0x4] sm:$0xf] %vm1447, %v1579
      %1675 = vst.msk [vmem:[%s1672 + $0x8] sm:$0xf] %vm1447, %v1581
      %1676 = vst.msk [vmem:[%s1672 + $0xc] sm:$0xf] %vm1447, %v1583
      %1677 = vst.msk [vmem:[%s1672 + $0x10] sm:$0xf] %vm1447, %v1585
      %1678 = vst.msk [vmem:[%s1672 + $0x14] sm:$0xf] %vm1447, %v1587
      %1679 = vst.msk [vmem:[%s1672 + $0x18] sm:$0xf] %vm1447, %v1589
      %1680 = vst.msk [vmem:[%s1672 + $0x1c] sm:$0xf] %vm1447, %v1591
      %1681 = vst.msk [vmem:[%s1672 + $0x20] sm:$0xf] %vm1447, %v1593
      %1682 = vst.msk [vmem:[%s1672 + $0x24] sm:$0xf] %vm1447, %v1595
      %1683 = vst.msk [vmem:[%s1672 + $0x28] sm:$0xf] %vm1447, %v1597
      %1684 = vst.msk [vmem:[%s1672 + $0x2c] sm:$0xf] %vm1447, %v1599
      %1685 = vst.msk [vmem:[%s1672 + $0x30] sm:$0xf] %vm1447, %v1601
      %1686 = vst.msk [vmem:[%s1672 + $0x34] sm:$0xf] %vm1447, %v1603
      %1687 = vst.msk [vmem:[%s1672 + $0x38] sm:$0xf] %vm1447, %v1605
      %1688 = vst.msk [vmem:[%s1672 + $0x3c] sm:$0xf] %vm1447, %v1607
      %1689 = vst.msk [vmem:[%s1672 + $0x40] sm:$0xf] %vm1447, %v1609
      %1690 = vst.msk [vmem:[%s1672 + $0x44] sm:$0xf] %vm1447, %v1611
      %1691 = vst.msk [vmem:[%s1672 + $0x48] sm:$0xf] %vm1447, %v1613
      %1692 = vst.msk [vmem:[%s1672 + $0x4c] sm:$0xf] %vm1447, %v1615
      %1693 = vst.msk [vmem:[%s1672 + $0x50] sm:$0xf] %vm1447, %v1617
      %1694 = vst.msk [vmem:[%s1672 + $0x54] sm:$0xf] %vm1447, %v1619
      %1695 = vst.msk [vmem:[%s1672 + $0x58] sm:$0xf] %vm1447, %v1621
      %1696 = vst.msk [vmem:[%s1672 + $0x5c] sm:$0xf] %vm1447, %v1623
      %1697 = vst.msk [vmem:[%s1672 + $0x60] sm:$0xf] %vm1447, %v1625
      %1698 = vst.msk [vmem:[%s1672 + $0x64] sm:$0xf] %vm1447, %v1627
      %1699 = vst.msk [vmem:[%s1672 + $0x68] sm:$0xf] %vm1447, %v1629
      %1700 = vst.msk [vmem:[%s1672 + $0x6c] sm:$0xf] %vm1447, %v1631
      %1701 = vst.msk [vmem:[%s1672 + $0x70] sm:$0xf] %vm1447, %v1633
      %1702 = vst.msk [vmem:[%s1672 + $0x74] sm:$0xf] %vm1447, %v1635
      %1703 = vst.msk [vmem:[%s1672 + $0x78] sm:$0xf] %vm1447, %v1637
      %1704 = vst.msk [vmem:[%s1672 + $0x7c] sm:$0xf] %vm1447, %v1639
      %1737 = vrot.lane.b32.xlu0 %v1126, 124
      %v1738 = vpop.permute.xlu0 %1737
      %1739 = vrot.lane.b32.xlu0 %v1127, 124
      %v1740 = vpop.permute.xlu0 %1739
      %1741 = vrot.lane.b32.xlu0 %v1128, 124
      %v1742 = vpop.permute.xlu0 %1741
      %1743 = vrot.lane.b32.xlu0 %v1129, 124
      %v1744 = vpop.permute.xlu0 %1743
      %1745 = vrot.lane.b32.xlu0 %v1130, 124
      %v1746 = vpop.permute.xlu0 %1745
      %1747 = vrot.lane.b32.xlu0 %v1131, 124
      %v1748 = vpop.permute.xlu0 %1747
      %1749 = vrot.lane.b32.xlu0 %v1132, 124
      %v1750 = vpop.permute.xlu0 %1749
      %1751 = vrot.lane.b32.xlu0 %v1133, 124
      %v1752 = vpop.permute.xlu0 %1751
      %1753 = vrot.lane.b32.xlu0 %v1134, 124
      %v1754 = vpop.permute.xlu0 %1753
      %1755 = vrot.lane.b32.xlu0 %v1135, 124
      %v1756 = vpop.permute.xlu0 %1755
      %1757 = vrot.lane.b32.xlu0 %v1136, 124
      %v1758 = vpop.permute.xlu0 %1757
      %1759 = vrot.lane.b32.xlu0 %v1137, 124
      %v1760 = vpop.permute.xlu0 %1759
      %1761 = vrot.lane.b32.xlu0 %v1138, 124
      %v1762 = vpop.permute.xlu0 %1761
      %1763 = vrot.lane.b32.xlu0 %v1139, 124
      %v1764 = vpop.permute.xlu0 %1763
      %1765 = vrot.lane.b32.xlu0 %v1140, 124
      %v1766 = vpop.permute.xlu0 %1765
      %1767 = vrot.lane.b32.xlu0 %v1141, 124
      %v1768 = vpop.permute.xlu0 %1767
      %1769 = vrot.lane.b32.xlu0 %v1142, 124
      %v1770 = vpop.permute.xlu0 %1769
      %1771 = vrot.lane.b32.xlu0 %v1143, 124
      %v1772 = vpop.permute.xlu0 %1771
      %1773 = vrot.lane.b32.xlu0 %v1144, 124
      %v1774 = vpop.permute.xlu0 %1773
      %1775 = vrot.lane.b32.xlu0 %v1145, 124
      %v1776 = vpop.permute.xlu0 %1775
      %1777 = vrot.lane.b32.xlu0 %v1146, 124
      %v1778 = vpop.permute.xlu0 %1777
      %1779 = vrot.lane.b32.xlu0 %v1147, 124
      %v1780 = vpop.permute.xlu0 %1779
      %1781 = vrot.lane.b32.xlu0 %v1148, 124
      %v1782 = vpop.permute.xlu0 %1781
      %1783 = vrot.lane.b32.xlu0 %v1149, 124
      %v1784 = vpop.permute.xlu0 %1783
      %1785 = vrot.lane.b32.xlu0 %v1150, 124
      %v1786 = vpop.permute.xlu0 %1785
      %1787 = vrot.lane.b32.xlu0 %v1151, 124
      %v1788 = vpop.permute.xlu0 %1787
      %1789 = vrot.lane.b32.xlu0 %v1152, 124
      %v1790 = vpop.permute.xlu0 %1789
      %1791 = vrot.lane.b32.xlu0 %v1153, 124
      %v1792 = vpop.permute.xlu0 %1791
      %1793 = vrot.lane.b32.xlu0 %v1154, 124
      %v1794 = vpop.permute.xlu0 %1793
      %1795 = vrot.lane.b32.xlu0 %v1155, 124
      %v1796 = vpop.permute.xlu0 %1795
      %1797 = vrot.lane.b32.xlu0 %v1156, 124
      %v1798 = vpop.permute.xlu0 %1797
      %1799 = vrot.lane.b32.xlu0 %v1157, 124
      %v1800 = vpop.permute.xlu0 %1799
      %s1833 = scalar_lea.vmem %s533, 128
      %1834 = vst.msk [vmem:[%s1833] sm:$0xf] %vm1447, %v1738
      %1835 = vst.msk [vmem:[%s1833 + $0x4] sm:$0xf] %vm1447, %v1740
      %1836 = vst.msk [vmem:[%s1833 + $0x8] sm:$0xf] %vm1447, %v1742
      %1837 = vst.msk [vmem:[%s1833 + $0xc] sm:$0xf] %vm1447, %v1744
      %1838 = vst.msk [vmem:[%s1833 + $0x10] sm:$0xf] %vm1447, %v1746
      %1839 = vst.msk [vmem:[%s1833 + $0x14] sm:$0xf] %vm1447, %v1748
      %1840 = vst.msk [vmem:[%s1833 + $0x18] sm:$0xf] %vm1447, %v1750
      %1841 = vst.msk [vmem:[%s1833 + $0x1c] sm:$0xf] %vm1447, %v1752
      %1842 = vst.msk [vmem:[%s1833 + $0x20] sm:$0xf] %vm1447, %v1754
      %1843 = vst.msk [vmem:[%s1833 + $0x24] sm:$0xf] %vm1447, %v1756
      %1844 = vst.msk [vmem:[%s1833 + $0x28] sm:$0xf] %vm1447, %v1758
      %1845 = vst.msk [vmem:[%s1833 + $0x2c] sm:$0xf] %vm1447, %v1760
      %1846 = vst.msk [vmem:[%s1833 + $0x30] sm:$0xf] %vm1447, %v1762
      %1847 = vst.msk [vmem:[%s1833 + $0x34] sm:$0xf] %vm1447, %v1764
      %1848 = vst.msk [vmem:[%s1833 + $0x38] sm:$0xf] %vm1447, %v1766
      %1849 = vst.msk [vmem:[%s1833 + $0x3c] sm:$0xf] %vm1447, %v1768
      %1850 = vst.msk [vmem:[%s1833 + $0x40] sm:$0xf] %vm1447, %v1770
      %1851 = vst.msk [vmem:[%s1833 + $0x44] sm:$0xf] %vm1447, %v1772
      %1852 = vst.msk [vmem:[%s1833 + $0x48] sm:$0xf] %vm1447, %v1774
      %1853 = vst.msk [vmem:[%s1833 + $0x4c] sm:$0xf] %vm1447, %v1776
      %1854 = vst.msk [vmem:[%s1833 + $0x50] sm:$0xf] %vm1447, %v1778
      %1855 = vst.msk [vmem:[%s1833 + $0x54] sm:$0xf] %vm1447, %v1780
      %1856 = vst.msk [vmem:[%s1833 + $0x58] sm:$0xf] %vm1447, %v1782
      %1857 = vst.msk [vmem:[%s1833 + $0x5c] sm:$0xf] %vm1447, %v1784
      %1858 = vst.msk [vmem:[%s1833 + $0x60] sm:$0xf] %vm1447, %v1786
      %1859 = vst.msk [vmem:[%s1833 + $0x64] sm:$0xf] %vm1447, %v1788
      %1860 = vst.msk [vmem:[%s1833 + $0x68] sm:$0xf] %vm1447, %v1790
      %1861 = vst.msk [vmem:[%s1833 + $0x6c] sm:$0xf] %vm1447, %v1792
      %1862 = vst.msk [vmem:[%s1833 + $0x70] sm:$0xf] %vm1447, %v1794
      %1863 = vst.msk [vmem:[%s1833 + $0x74] sm:$0xf] %vm1447, %v1796
      %1864 = vst.msk [vmem:[%s1833 + $0x78] sm:$0xf] %vm1447, %v1798
      %1865 = vst.msk [vmem:[%s1833 + $0x7c] sm:$0xf] %vm1447, %v1800
      %1898 = vrot.lane.b32.xlu0 %v1415, 124
      %v1899 = vpop.permute.xlu0 %1898
      %1900 = vrot.lane.b32.xlu0 %v1416, 124
      %v1901 = vpop.permute.xlu0 %1900
      %1902 = vrot.lane.b32.xlu0 %v1417, 124
      %v1903 = vpop.permute.xlu0 %1902
      %1904 = vrot.lane.b32.xlu0 %v1418, 124
      %v1905 = vpop.permute.xlu0 %1904
      %1906 = vrot.lane.b32.xlu0 %v1419, 124
      %v1907 = vpop.permute.xlu0 %1906
      %1908 = vrot.lane.b32.xlu0 %v1420, 124
      %v1909 = vpop.permute.xlu0 %1908
      %1910 = vrot.lane.b32.xlu0 %v1421, 124
      %v1911 = vpop.permute.xlu0 %1910
      %1912 = vrot.lane.b32.xlu0 %v1422, 124
      %v1913 = vpop.permute.xlu0 %1912
      %1914 = vrot.lane.b32.xlu0 %v1423, 124
      %v1915 = vpop.permute.xlu0 %1914
      %1916 = vrot.lane.b32.xlu0 %v1424, 124
      %v1917 = vpop.permute.xlu0 %1916
      %1918 = vrot.lane.b32.xlu0 %v1425, 124
      %v1919 = vpop.permute.xlu0 %1918
      %1920 = vrot.lane.b32.xlu0 %v1426, 124
      %v1921 = vpop.permute.xlu0 %1920
      %1922 = vrot.lane.b32.xlu0 %v1427, 124
      %v1923 = vpop.permute.xlu0 %1922
      %1924 = vrot.lane.b32.xlu0 %v1428, 124
      %v1925 = vpop.permute.xlu0 %1924
      %1926 = vrot.lane.b32.xlu0 %v1429, 124
      %v1927 = vpop.permute.xlu0 %1926
      %1928 = vrot.lane.b32.xlu0 %v1430, 124
      %v1929 = vpop.permute.xlu0 %1928
      %1930 = vrot.lane.b32.xlu0 %v1431, 124
      %v1931 = vpop.permute.xlu0 %1930
      %1932 = vrot.lane.b32.xlu0 %v1432, 124
      %v1933 = vpop.permute.xlu0 %1932
      %1934 = vrot.lane.b32.xlu0 %v1433, 124
      %v1935 = vpop.permute.xlu0 %1934
      %1936 = vrot.lane.b32.xlu0 %v1434, 124
      %v1937 = vpop.permute.xlu0 %1936
      %1938 = vrot.lane.b32.xlu0 %v1435, 124
      %v1939 = vpop.permute.xlu0 %1938
      %1940 = vrot.lane.b32.xlu0 %v1436, 124
      %v1941 = vpop.permute.xlu0 %1940
      %1942 = vrot.lane.b32.xlu0 %v1437, 124
      %v1943 = vpop.permute.xlu0 %1942
      %1944 = vrot.lane.b32.xlu0 %v1438, 124
      %v1945 = vpop.permute.xlu0 %1944
      %1946 = vrot.lane.b32.xlu0 %v1439, 124
      %v1947 = vpop.permute.xlu0 %1946
      %1948 = vrot.lane.b32.xlu0 %v1440, 124
      %v1949 = vpop.permute.xlu0 %1948
      %1950 = vrot.lane.b32.xlu0 %v1441, 124
      %v1951 = vpop.permute.xlu0 %1950
      %1952 = vrot.lane.b32.xlu0 %v1442, 124
      %v1953 = vpop.permute.xlu0 %1952
      %1954 = vrot.lane.b32.xlu0 %v1443, 124
      %v1955 = vpop.permute.xlu0 %1954
      %1956 = vrot.lane.b32.xlu0 %v1444, 124
      %v1957 = vpop.permute.xlu0 %1956
      %1958 = vrot.lane.b32.xlu0 %v1445, 124
      %v1959 = vpop.permute.xlu0 %1958
      %1960 = vrot.lane.b32.xlu0 %v1446, 124
      %v1961 = vpop.permute.xlu0 %1960
      %s1994 = scalar_lea.vmem %s543, 128
      %1995 = vst.msk [vmem:[%s1994] sm:$0xf] %vm1447, %v1899
      %1996 = vst.msk [vmem:[%s1994 + $0x4] sm:$0xf] %vm1447, %v1901
      %1997 = vst.msk [vmem:[%s1994 + $0x8] sm:$0xf] %vm1447, %v1903
      %1998 = vst.msk [vmem:[%s1994 + $0xc] sm:$0xf] %vm1447, %v1905
      %1999 = vst.msk [vmem:[%s1994 + $0x10] sm:$0xf] %vm1447, %v1907
      %2000 = vst.msk [vmem:[%s1994 + $0x14] sm:$0xf] %vm1447, %v1909
      %2001 = vst.msk [vmem:[%s1994 + $0x18] sm:$0xf] %vm1447, %v1911
      %2002 = vst.msk [vmem:[%s1994 + $0x1c] sm:$0xf] %vm1447, %v1913
      %2003 = vst.msk [vmem:[%s1994 + $0x20] sm:$0xf] %vm1447, %v1915
      %2004 = vst.msk [vmem:[%s1994 + $0x24] sm:$0xf] %vm1447, %v1917
      %2005 = vst.msk [vmem:[%s1994 + $0x28] sm:$0xf] %vm1447, %v1919
      %2006 = vst.msk [vmem:[%s1994 + $0x2c] sm:$0xf] %vm1447, %v1921
      %2007 = vst.msk [vmem:[%s1994 + $0x30] sm:$0xf] %vm1447, %v1923
      %2008 = vst.msk [vmem:[%s1994 + $0x34] sm:$0xf] %vm1447, %v1925
      %2009 = vst.msk [vmem:[%s1994 + $0x38] sm:$0xf] %vm1447, %v1927
      %2010 = vst.msk [vmem:[%s1994 + $0x3c] sm:$0xf] %vm1447, %v1929
      %2011 = vst.msk [vmem:[%s1994 + $0x40] sm:$0xf] %vm1447, %v1931
      %2012 = vst.msk [vmem:[%s1994 + $0x44] sm:$0xf] %vm1447, %v1933
      %2013 = vst.msk [vmem:[%s1994 + $0x48] sm:$0xf] %vm1447, %v1935
      %2014 = vst.msk [vmem:[%s1994 + $0x4c] sm:$0xf] %vm1447, %v1937
      %2015 = vst.msk [vmem:[%s1994 + $0x50] sm:$0xf] %vm1447, %v1939
      %2016 = vst.msk [vmem:[%s1994 + $0x54] sm:$0xf] %vm1447, %v1941
      %2017 = vst.msk [vmem:[%s1994 + $0x58] sm:$0xf] %vm1447, %v1943
      %2018 = vst.msk [vmem:[%s1994 + $0x5c] sm:$0xf] %vm1447, %v1945
      %2019 = vst.msk [vmem:[%s1994 + $0x60] sm:$0xf] %vm1447, %v1947
      %2020 = vst.msk [vmem:[%s1994 + $0x64] sm:$0xf] %vm1447, %v1949
      %2021 = vst.msk [vmem:[%s1994 + $0x68] sm:$0xf] %vm1447, %v1951
      %2022 = vst.msk [vmem:[%s1994 + $0x6c] sm:$0xf] %vm1447, %v1953
      %2023 = vst.msk [vmem:[%s1994 + $0x70] sm:$0xf] %vm1447, %v1955
      %2024 = vst.msk [vmem:[%s1994 + $0x74] sm:$0xf] %vm1447, %v1957
      %2025 = vst.msk [vmem:[%s1994 + $0x78] sm:$0xf] %vm1447, %v1959
      %2026 = vst.msk [vmem:[%s1994 + $0x7c] sm:$0xf] %vm1447, %v1961
      %s2027 = smul.u32 32, %s28
      %p2028 = scmp.lt.s32.totalorder %s27, 1
      %s2029 = scalar_select %p2028, %s27, 1
      %p2030 = scmp.lt.s32.totalorder %s2027, 31
      %s2031 = scalar_select %p2030, %s2027, 31
      %s2032 = smul.addr %s2029, 64
      %s2033 = sadd.s32 %s2031, %s2032
      %s2034 = smul.addr %s2033, 4
      %s2035 = scalar_lea.vmem %s9, %s2034
      %s2036 = smul.u32 32, %s28
      %p2037 = scmp.lt.s32.totalorder %s27, 1
      %s2038 = scalar_select %p2037, %s27, 1
      %p2039 = scmp.lt.s32.totalorder %s2036, 31
      %s2040 = scalar_select %p2039, %s2036, 31
      %s2041 = smul.addr %s2038, 64
      %s2042 = sadd.s32 %s2040, %s2041
      %s2043 = smul.addr %s2042, 4
      %s2044 = scalar_lea.vmem %s10, %s2043
      %s2045 = smul.u32 32, %s28
      %p2046 = scmp.lt.s32.totalorder %s27, 1
      %s2047 = scalar_select %p2046, %s27, 1
      %p2048 = scmp.lt.s32.totalorder %s2045, 31
      %s2049 = scalar_select %p2048, %s2045, 31
      %s2050 = smul.addr %s2047, 64
      %s2051 = sadd.s32 %s2049, %s2050
      %s2052 = smul.addr %s2051, 4
      %s2053 = scalar_lea.vmem %s11, %s2052
      // Predicated region
      $region57: #{tpu_custom_call.1} parent=55 // pred_check
        %p2054 = pneg %p265
      $region58: #{tpu_custom_call.1} parent=55 // pred_check_branch
        %2056 = sbr.rel (%p2054) target = $region60
      $region59: #{tpu_custom_call.1} parent=55 // pred_region
        %s2057 = smul.u32 32, %s28
      $region60: #{tpu_custom_call.1} parent=55 // pred_fallthru
        _
      // Predicated region
      $region61: #{tpu_custom_call.1} parent=55 // pred_check
        %p2058 = pneg %p293
      $region62: #{tpu_custom_call.1} parent=55 // pred_check_branch
        %2060 = sbr.rel (%p2058) target = $region64
      $region63: #{tpu_custom_call.1} parent=55 // pred_region
        %s2061 = smul.u32 32, %s28
      $region64: #{tpu_custom_call.1} parent=55 // pred_fallthru
        _
      // Predicated region
      $region65: #{tpu_custom_call.1} parent=55 // pred_check
        %p2062 = pneg %p321
      $region66: #{tpu_custom_call.1} parent=55 // pred_check_branch
        %2064 = sbr.rel (%p2062) target = $region68
      $region67: #{tpu_custom_call.1} parent=55 // pred_region
        %s2065 = smul.u32 32, %s28
      $region68: #{tpu_custom_call.1} parent=55 // pred_fallthru
        _
    $region56: #{tpu_custom_call.1} parent=5 // pred_fallthru
      _
    %p2066 = scmp.le.s32.totalorder 2, %s18
    // Predicated region
    $region69: #{tpu_custom_call.1} parent=5 // pred_check
      %p2067 = pneg %p2066
    $region70: #{tpu_custom_call.1} parent=5 // pred_check_branch
      %2069 = sbr.rel (%p2067) target = $region72
    $region71: #{tpu_custom_call.1} parent=5 // pred_region
      %s2070 = ssub.s32 %s18, 2
      // Predicated region
      $region73: #{tpu_custom_call.1} parent=71 // pred_check
        %p2071 = pneg %p271
      $region74: #{tpu_custom_call.1} parent=71 // pred_check_branch
        %2073 = sbr.rel (%p2071) target = $region76
      $region75: #{tpu_custom_call.1} parent=71 // pred_region
        %s2074 = smul.u32 32, %s30
        %p2075 = scmp.lt.s32.totalorder %s29, 1
        %s2076 = scalar_select %p2075, %s29, 1
        %p2077 = scmp.lt.s32.totalorder %s2074, 31
        %s2078 = scalar_select %p2077, %s2074, 31
        %s2079 = smul.addr %s2076, 64
        %s2080 = sadd.s32 %s2078, %s2079
        %s2081 = smul.addr %s2080, 4
        %s2082 = scalar_lea.vmem %s9, %s2081
      $region76: #{tpu_custom_call.1} parent=71 // pred_fallthru
        _
      // Predicated region
      $region77: #{tpu_custom_call.1} parent=71 // pred_check
        %p2083 = pneg %p299
      $region78: #{tpu_custom_call.1} parent=71 // pred_check_branch
        %2085 = sbr.rel (%p2083) target = $region80
      $region79: #{tpu_custom_call.1} parent=71 // pred_region
        %s2086 = smul.u32 32, %s30
        %p2087 = scmp.lt.s32.totalorder %s29, 1
        %s2088 = scalar_select %p2087, %s29, 1
        %p2089 = scmp.lt.s32.totalorder %s2086, 31
        %s2090 = scalar_select %p2089, %s2086, 31
        %s2091 = smul.addr %s2088, 64
        %s2092 = sadd.s32 %s2090, %s2091
        %s2093 = smul.addr %s2092, 4
        %s2094 = scalar_lea.vmem %s10, %s2093
      $region80: #{tpu_custom_call.1} parent=71 // pred_fallthru
        _
      // Predicated region
      $region81: #{tpu_custom_call.1} parent=71 // pred_check
        %p2095 = pneg %p327
      $region82: #{tpu_custom_call.1} parent=71 // pred_check_branch
        %2097 = sbr.rel (%p2095) target = $region84
      $region83: #{tpu_custom_call.1} parent=71 // pred_region
        %s2098 = smul.u32 32, %s30
        %p2099 = scmp.lt.s32.totalorder %s29, 1
        %s2100 = scalar_select %p2099, %s29, 1
        %p2101 = scmp.lt.s32.totalorder %s2098, 31
        %s2102 = scalar_select %p2101, %s2098, 31
        %s2103 = smul.addr %s2100, 64
        %s2104 = sadd.s32 %s2102, %s2103
        %s2105 = smul.addr %s2104, 4
        %s2106 = scalar_lea.vmem %s11, %s2105
      $region84: #{tpu_custom_call.1} parent=71 // pred_fallthru
        _
    $region72: #{tpu_custom_call.1} parent=5 // pred_fallthru
      _
  $region6: #{tpu_custom_call.1} parent=0 // loop_footer
    %s22 = sadd.s32 1, %s18
  $region7: #{tpu_custom_call.1} parent=0 // loop_footer_branch
    %17 = sbr.rel target = $region3
  $region8: #{tpu_custom_call.1} parent=0 // loop_exit
    _

</llo_original>
